<compile_context>
chip_gen: v7x
topology: tpu7x:2x2x1
jax: 0.10.0
libtpu: 0.0.40
codegen_flags: <defaults>
</compile_context>

<pallas_src>
import functools

import jax
import jax.numpy as jnp
from jax import lax
from jax.experimental import pallas as pl
from jax.experimental.pallas import tpu as pltpu


def ssm_chunk_kernel(x_ref, apow_ref, bt_ref, ct_ref, o_ref,
                     uh_ref, w_ref, uhead_ref, hcarry_ref,
                     *, bsz_grp, chunk_t, kstep, log2k, feed_dtype, unroll):
    """One grid step = one (batch-group, time-chunk) tile.

    x_ref:    (chunk_t*bsz_grp, I)           inputs, time-major rows (row = t*bsz_grp + b)
    apow_ref: (log2k+1, S, S)                [(A)^T, (A^2)^T, ..., (A^kstep)^T]
    bt_ref:   (I, S)                         B^T
    ct_ref:   (S, out_pad)                   C^T, lane padded
    o_ref:    (chunk_t*bsz_grp, out_pad)     outputs (lane-dense slab)
    uh_ref:   VMEM (chunk_t*bsz_grp, S) f32  holds U -> V_kstep -> H in place
    w_ref:    VMEM (chunk_t*bsz_grp, S) f32  doubling temp
    uhead_ref:VMEM (kstep*bsz_grp, S)   f32  prologue H (first kstep timesteps)
    hcarry_ref:VMEM (bsz_grp, S)        f32  hidden state carried across chunks
    """
    f32 = jnp.float32
    chunk_rows = chunk_t * bsz_grp
    blk = kstep * bsz_grp           # rows advanced per dependent step
    nsup = chunk_t // kstep         # dependent steps per chunk

    # New (batch-group) stream starts -> reset the carried hidden state.
    @pl.when(pl.program_id(1) == 0)
    def _init():
        hcarry_ref[...] = jnp.zeros_like(hcarry_ref)

    # (1) Input projection for the whole chunk: U = X @ B^T (one MXU matmul).
    uh_ref[...] = jnp.dot(x_ref[...], bt_ref[...], preferred_element_type=f32)

    # (2) Prologue: first `kstep` timesteps with the plain single-step recurrence
    #     from the carried state (reads original U rows before they are rewritten).
    a1 = apow_ref[0]                       # A^T; live only across this short loop
    h = hcarry_ref[...]                    # f32 carry
    for i in range(kstep):                 # static, tiny (kstep <= 4)
        r0 = i * bsz_grp
        h = (jnp.dot(h.astype(feed_dtype), a1, preferred_element_type=f32)
             + uh_ref[r0:r0 + bsz_grp, :])
        uhead_ref[r0:r0 + bsz_grp, :] = h

    # (3) Recursive doubling (chunk-wide, h-independent, off the serial path):
    #       V_2m[t] = V_m[t] + V_m[t-m] @ (A^m)^T
    for j in range(1, log2k + 1):
        srows = (1 << (j - 1)) * bsz_grp
        rows = chunk_rows - srows
        w_ref[0:rows, :] = jnp.dot(uh_ref[0:rows, :].astype(feed_dtype),
                                   apow_ref[j - 1],
                                   preferred_element_type=f32)
        uh_ref[srows:chunk_rows, :] = uh_ref[srows:chunk_rows, :] + w_ref[0:rows, :]

    # Timesteps 0..kstep-1 now hold H (from the prologue).
    uh_ref[0:blk, :] = uhead_ref[...]

    # (4) The only remaining serial chain: nsup-1 dependent (blk, S) @ (S, S)
    #     matmuls, each advancing `kstep` timesteps for all batch rows at once.
    #     (A^kstep)^T is re-read from VMEM inside the body rather than held live
    #     across the whole loop (avoids S^2 worth of vregs for large S).
    def body(j, hprev):
        row = pl.multiple_of(j * blk, blk)          # 8-aligned full-sublane offset
        hnew = (jnp.dot(hprev.astype(feed_dtype), apow_ref[log2k],
                        preferred_element_type=f32)
                + uh_ref[pl.ds(row, blk), :])
        uh_ref[pl.ds(row, blk), :] = hnew
        return hnew

    hlast = lax.fori_loop(1, nsup, body, uhead_ref[...], unroll=unroll)

    # Carry h_{chunk_t-1} (kept in f32) into the next chunk.
    hcarry_ref[...] = hlast[(kstep - 1) * bsz_grp:, :]

    # (5) Output projection for the whole chunk: Y = H @ C^T (lane-dense store).
    o_ref[...] = jnp.dot(uh_ref[...].astype(feed_dtype), ct_ref[...],
                         preferred_element_type=f32).astype(o_ref.dtype)


def ssm_forward(x, A, B, C, *, chunk_t=None, kstep=4, mxu_dtype=jnp.bfloat16,
                num_batch_groups=None, unroll=None):
    """x: [batch, seq, input_dim] -> y: [batch, seq, output_dim] (recursive SSM)."""
    bsz, T, input_dim = x.shape
    state_dim = A.shape[0]
    out_dim = C.shape[0]
    out_dtype = x.dtype
    feed_dtype = jnp.dtype(mxu_dtype) if mxu_dtype is not None else jnp.dtype(x.dtype)

    # ---- batch padding / optional batch groups (parallel grid axis, v7x 2nd TC).
    bsz_pad = ((bsz + 7) // 8) * 8
    if num_batch_groups is None:
        try:
            kind = str(jax.devices()[0].device_kind).lower()
        except Exception:  # pragma: no cover - best effort detection only
            kind = ""
        # v7x has 2 TensorCores/chip; splitting the batch only helps there.
        num_batch_groups = 2 if ("v7" in kind and bsz_pad >= 16) else 1
    num_batch_groups = max(1, min(int(num_batch_groups), bsz_pad // 8))
    grp = ((-(-bsz_pad // num_batch_groups) + 7) // 8) * 8     # 8-aligned group size
    bsz_pad = grp * num_batch_groups

    # ---- multi-step (A-power) recurrence: kstep in {1, 2, 4}.
    kstep = 1 if kstep < 2 else (2 if kstep < 4 else 4)
    log2k = kstep.bit_length() - 1

    # ---- lane-dense output slab.
    out_pad = ((out_dim + 127) // 128) * 128

    # ---- chunk the sequence; size the chunk against a conservative VMEM budget
    #      (v7x only has 64 MiB physical VMEM; v5e/v6e have 128 MiB).
    feed_bytes = jnp.dtype(feed_dtype).itemsize
    out_bytes = jnp.dtype(out_dtype).itemsize
    bytes_per_t = grp * (2 * input_dim * feed_bytes     # x block, double-buffered
                         + 2 * out_pad * out_bytes      # y block, double-buffered
                         + 2 * state_dim * 4)           # uh + w scratch (f32)
    if chunk_t is None:
        budget = 24 << 20
        chunk_t = min(max(T, 1),
                      256 if grp <= 32 else 128,        # bigger chunks for small batch
                      max(kstep, budget // max(bytes_per_t, 1)))
    chunk_t = max(kstep, ((int(chunk_t) + kstep - 1) // kstep) * kstep)
    num_chunks = pl.cdiv(T, chunk_t)
    T_pad = num_chunks * chunk_t
    chunk_rows = chunk_t * grp
    if unroll is None:
        unroll = int(max(1, min(8, chunk_t // kstep - 1)))

    # ---- layout: time-major, batch padded, split into groups, flattened to rows
    #      (row = t * grp + b).  NOTE: this transpose/pad is an extra HBM round
    #      trip of x; producers that can emit time-major input should skip it.
    x_tm = jnp.transpose(x, (1, 0, 2))                                     # (T, B, I)
    x_tm = jnp.pad(x_tm, ((0, T_pad - T), (0, bsz_pad - bsz), (0, 0)))
    x_g = (x_tm.reshape(T_pad, num_batch_groups, grp, input_dim)
               .transpose(1, 0, 2, 3)
               .reshape(num_batch_groups, T_pad * grp, input_dim)
               .astype(feed_dtype))

    # ---- parameters: pre-transposed; A powers computed in f32, then cast to the
    #      MXU feed dtype (bf16 by default).  (A^{2^j})^T == (A^T)^{2^j}.
    apow = [jnp.transpose(A).astype(jnp.float32)]
    for _ in range(log2k):
        apow.append(apow[-1] @ apow[-1])
    apow_t = jnp.stack(apow, axis=0).astype(feed_dtype)                   # (L, S, S)
    b_t = jnp.transpose(B).astype(feed_dtype)                             # (I, S)
    c_t = jnp.pad(jnp.transpose(C),
                  ((0, 0), (0, out_pad - out_dim))).astype(feed_dtype)    # (S, O_pad)

    # ---- explicit VMEM budget for the compiler.
    param_bytes = (apow_t.size + b_t.size + c_t.size) * feed_bytes
    est_vmem = (chunk_t * bytes_per_t + 2 * param_bytes
                + (kstep + 1) * grp * state_dim * 4)
    vmem_limit = int(min(max(2 * est_vmem, 32 << 20), 64 << 20))

    kernel = functools.partial(
        ssm_chunk_kernel, bsz_grp=grp, chunk_t=chunk_t, kstep=kstep,
        log2k=log2k, feed_dtype=feed_dtype, unroll=unroll)

    y_rows = pl.pallas_call(
        kernel,
        out_shape=jax.ShapeDtypeStruct(
            (num_batch_groups, T_pad * grp, out_pad), out_dtype),
        grid_spec=pltpu.PrefetchScalarGridSpec(
            num_scalar_prefetch=0,
            grid=(num_batch_groups, num_chunks),
            in_specs=[
                pl.BlockSpec((None, chunk_rows, input_dim),
                             lambda g, c: (g, c, 0)),                     # x chunk
                # Invariant weights (constant index maps -> fetched once).
                pl.BlockSpec((log2k + 1, state_dim, state_dim),
                             lambda g, c: (0, 0, 0)),                     # A powers^T
                pl.BlockSpec((input_dim, state_dim), lambda g, c: (0, 0)),  # B^T
                pl.BlockSpec((state_dim, out_pad), lambda g, c: (0, 0)),    # C^T
            ],
            out_specs=pl.BlockSpec((None, chunk_rows, out_pad),
                                   lambda g, c: (g, c, 0)),
            scratch_shapes=[
                pltpu.VMEM((chunk_rows, state_dim), jnp.float32),   # U / V / H slab
                pltpu.VMEM((chunk_rows, state_dim), jnp.float32),   # doubling temp
                pltpu.VMEM((kstep * grp, state_dim), jnp.float32),  # prologue H
                pltpu.VMEM((grp, state_dim), jnp.float32),          # carried h (f32)
            ],
        ),
        compiler_params=pltpu.CompilerParams(
            # Batch groups are independent -> "parallel" (2nd TensorCore on v7x);
            # the chunk axis carries the recurrence -> must stay "arbitrary".
            dimension_semantics=("parallel", "arbitrary"),
            vmem_limit_bytes=vmem_limit,
        ),
    )(x_g, apow_t, b_t, c_t)

    y = y_rows.reshape(num_batch_groups, T_pad, grp, out_pad)
    y = jnp.transpose(y, (1, 0, 2, 3)).reshape(T_pad, bsz_pad, out_pad)
    y = y[:T, :bsz, :out_dim]
    return jnp.transpose(y, (1, 0, 2))


def ssm_reference(x, A, B, C):
    """Pure-JAX reference matching SSM.forward_recursive semantics."""
    def step(h, x_t):
        h = h @ A.T + x_t @ B.T
        return h, h @ C.T

    h0 = jnp.zeros((x.shape[0], A.shape[0]), x.dtype)
    _, ys = lax.scan(step, h0, jnp.transpose(x, (1, 0, 2)))
    return jnp.transpose(ys, (1, 0, 2))


if __name__ == "__main__":
    # Small shapes consistent with the module's forward (recursive mode).
    batch, seq_len = 2, 8
    input_dim, state_dim, output_dim = 16, 32, 16

    key = jax.random.PRNGKey(0)
    k_a, k_b, k_c, k_x = jax.random.split(key, 4)

    # Deterministic parameter init (torch.randn analog).
    A = jax.random.normal(k_a, (state_dim, state_dim), dtype=jnp.float32)
    B = jax.random.normal(k_b, (state_dim, input_dim), dtype=jnp.float32)
    C = jax.random.normal(k_c, (output_dim, state_dim), dtype=jnp.float32)
    x = jax.random.normal(k_x, (batch, seq_len, input_dim), dtype=jnp.float32)

    y_ref = ssm_reference(x, A, B, C)
    scale = jnp.max(jnp.abs(y_ref)) + 1e-30

    # Exact-precision path (f32 MXU feed): tight check against the step reference.
    y_f32 = jax.block_until_ready(ssm_forward(x, A, B, C, mxu_dtype=jnp.float32))
    assert y_f32.shape == (batch, seq_len, output_dim)
    err_f32 = float(jnp.max(jnp.abs(y_f32 - y_ref)) / scale)
    assert err_f32 < 1e-4, f"f32 path mismatch vs reference: {err_f32}"

    # Default path (bf16 MXU feed, f32 accumulators): loose check (bf16 rounding
    # on a growing recurrence).
    y_bf = jax.block_until_ready(ssm_forward(x, A, B, C))
    assert y_bf.shape == (batch, seq_len, output_dim)
    err_bf = float(jnp.max(jnp.abs(y_bf - y_ref)) / scale)
    assert err_bf < 1e-1, f"bf16 path mismatch vs reference: {err_bf}"

    print("KERNEL_OK")
</pallas_src>

<mosaic_0001>
module attributes {stable_mosaic.version = 11 : i64} {
  func.func @ssm_chunk_kernel(%arg0: i32, %arg1: i32, %arg2: memref<1x64x16xf32, #tpu.memory_space<vmem>>, %arg3: memref<3x32x32xf32, #tpu.memory_space<vmem>>, %arg4: memref<16x32xf32, #tpu.memory_space<vmem>>, %arg5: memref<32x128xf32, #tpu.memory_space<vmem>>, %arg6: memref<1x64x128xf32, #tpu.memory_space<vmem>>, %arg7: memref<64x32xf32, #tpu.memory_space<vmem>>, %arg8: memref<64x32xf32, #tpu.memory_space<vmem>>, %arg9: memref<32x32xf32, #tpu.memory_space<vmem>>, %arg10: memref<8x32xf32, #tpu.memory_space<vmem>>) attributes {dimension_semantics = [#tpu.dimension_semantics<parallel>, #tpu.dimension_semantics<arbitrary>], iteration_bounds = array<i64: 1, 1>, scalar_prefetch = 0 : i64, scratch_operands = 4 : i64, tpu.core_type = #tpu.core_type<tc>, window_params = [{transform_indices = @transform_0, window_bounds = array<i64: 1, 64, 16>}, {pipeline_mode = #tpu.pipeline_mode<synchronous>, transform_indices = @transform_1, window_bounds = array<i64: 3, 32, 32>}, {pipeline_mode = #tpu.pipeline_mode<synchronous>, transform_indices = @transform_2, window_bounds = array<i64: 16, 32>}, {pipeline_mode = #tpu.pipeline_mode<synchronous>, transform_indices = @transform_3, window_bounds = array<i64: 32, 128>}, {transform_indices = @transform_4, window_bounds = array<i64: 1, 64, 128>}]} {
    %c0_i32 = arith.constant 0 : i32
    %0 = arith.cmpi eq, %arg1, %c0_i32 : i32
    %1 = arith.extui %0 : i1 to i32
    %c0_i32_0 = arith.constant 0 : i32
    %2 = arith.cmpi ne, %1, %c0_i32_0 : i32
    scf.if %2 {
      %cst_78 = arith.constant 0.000000e+00 : f32
      %66 = vector.broadcast %cst_78 : f32 to vector<8x32xf32>
      %c0_79 = arith.constant 0 : index
      %c0_80 = arith.constant 0 : index
      %67 = vector.load %arg10[%c0_79, %c0_80] : memref<8x32xf32, #tpu.memory_space<vmem>>, vector<8x32xf32>
      tpu.vector_store %arg10[%c0_79, %c0_80], %66 {strides = array<i32>} : memref<8x32xf32, #tpu.memory_space<vmem>>, vector<8x32xf32>,
    } else {
    }
    %c0 = arith.constant 0 : index
    %c0_1 = arith.constant 0 : index
    %c0_2 = arith.constant 0 : index
    %3 = vector.load %arg2[%c0, %c0_1, %c0_2] : memref<1x64x16xf32, #tpu.memory_space<vmem>>, vector<1x64x16xf32>
    %4 = vector.shape_cast %3 : vector<1x64x16xf32> to vector<64x16xf32>
    %c0_3 = arith.constant 0 : index
    %c0_4 = arith.constant 0 : index
    %5 = vector.load %arg4[%c0_3, %c0_4] : memref<16x32xf32, #tpu.memory_space<vmem>>, vector<16x32xf32>
    %cst = arith.constant dense<0.000000e+00> : vector<64x32xf32>
    %6 = tpu.matmul %4, %5, %cst {dimension_numbers = #tpu.dot_dimension_numbers<[1], [0], [0], [1], [0, 0, 1, 1], [], []>} : vector<64x16xf32>, vector<16x32xf32>, vector<64x32xf32> -> vector<64x32xf32>
    %c0_5 = arith.constant 0 : index
    %c0_6 = arith.constant 0 : index
    %7 = vector.load %arg7[%c0_5, %c0_6] : memref<64x32xf32, #tpu.memory_space<vmem>>, vector<64x32xf32>
    tpu.vector_store %arg7[%c0_5, %c0_6], %6 {strides = array<i32>} : memref<64x32xf32, #tpu.memory_space<vmem>>, vector<64x32xf32>,
    %c0_7 = arith.constant 0 : index
    %c0_8 = arith.constant 0 : index
    %c0_9 = arith.constant 0 : index
    %8 = vector.load %arg3[%c0_7, %c0_8, %c0_9] : memref<3x32x32xf32, #tpu.memory_space<vmem>>, vector<1x32x32xf32>
    %9 = vector.shape_cast %8 : vector<1x32x32xf32> to vector<32x32xf32>
    %c0_10 = arith.constant 0 : index
    %c0_11 = arith.constant 0 : index
    %10 = vector.load %arg10[%c0_10, %c0_11] : memref<8x32xf32, #tpu.memory_space<vmem>>, vector<8x32xf32>
    %cst_12 = arith.constant dense<0.000000e+00> : vector<8x32xf32>
    %11 = tpu.matmul %10, %9, %cst_12 {dimension_numbers = #tpu.dot_dimension_numbers<[1], [0], [0], [1], [0, 0, 1, 1], [], []>} : vector<8x32xf32>, vector<32x32xf32>, vector<8x32xf32> -> vector<8x32xf32>
    %c0_13 = arith.constant 0 : index
    %c0_14 = arith.constant 0 : index
    %12 = vector.load %arg7[%c0_13, %c0_14] : memref<64x32xf32, #tpu.memory_space<vmem>>, vector<8x32xf32>
    %13 = arith.addf %11, %12 : vector<8x32xf32>
    %c0_15 = arith.constant 0 : index
    %c0_16 = arith.constant 0 : index
    %14 = vector.load %arg9[%c0_15, %c0_16] : memref<32x32xf32, #tpu.memory_space<vmem>>, vector<8x32xf32>
    tpu.vector_store %arg9[%c0_15, %c0_16], %13 {strides = array<i32>} : memref<32x32xf32, #tpu.memory_space<vmem>>, vector<8x32xf32>,
    %cst_17 = arith.constant dense<0.000000e+00> : vector<8x32xf32>
    %15 = tpu.matmul %13, %9, %cst_17 {dimension_numbers = #tpu.dot_dimension_numbers<[1], [0], [0], [1], [0, 0, 1, 1], [], []>} : vector<8x32xf32>, vector<32x32xf32>, vector<8x32xf32> -> vector<8x32xf32>
    %c8 = arith.constant 8 : index
    %c0_18 = arith.constant 0 : index
    %16 = vector.load %arg7[%c8, %c0_18] : memref<64x32xf32, #tpu.memory_space<vmem>>, vector<8x32xf32>
    %17 = arith.addf %15, %16 : vector<8x32xf32>
    %c8_19 = arith.constant 8 : index
    %c0_20 = arith.constant 0 : index
    %18 = vector.load %arg9[%c8_19, %c0_20] : memref<32x32xf32, #tpu.memory_space<vmem>>, vector<8x32xf32>
    tpu.vector_store %arg9[%c8_19, %c0_20], %17 {strides = array<i32>} : memref<32x32xf32, #tpu.memory_space<vmem>>, vector<8x32xf32>,
    %cst_21 = arith.constant dense<0.000000e+00> : vector<8x32xf32>
    %19 = tpu.matmul %17, %9, %cst_21 {dimension_numbers = #tpu.dot_dimension_numbers<[1], [0], [0], [1], [0, 0, 1, 1], [], []>} : vector<8x32xf32>, vector<32x32xf32>, vector<8x32xf32> -> vector<8x32xf32>
    %c16 = arith.constant 16 : index
    %c0_22 = arith.constant 0 : index
    %20 = vector.load %arg7[%c16, %c0_22] : memref<64x32xf32, #tpu.memory_space<vmem>>, vector<8x32xf32>
    %21 = arith.addf %19, %20 : vector<8x32xf32>
    %c16_23 = arith.constant 16 : index
    %c0_24 = arith.constant 0 : index
    %22 = vector.load %arg9[%c16_23, %c0_24] : memref<32x32xf32, #tpu.memory_space<vmem>>, vector<8x32xf32>
    tpu.vector_store %arg9[%c16_23, %c0_24], %21 {strides = array<i32>} : memref<32x32xf32, #tpu.memory_space<vmem>>, vector<8x32xf32>,
    %cst_25 = arith.constant dense<0.000000e+00> : vector<8x32xf32>
    %23 = tpu.matmul %21, %9, %cst_25 {dimension_numbers = #tpu.dot_dimension_numbers<[1], [0], [0], [1], [0, 0, 1, 1], [], []>} : vector<8x32xf32>, vector<32x32xf32>, vector<8x32xf32> -> vector<8x32xf32>
    %c24 = arith.constant 24 : index
    %c0_26 = arith.constant 0 : index
    %24 = vector.load %arg7[%c24, %c0_26] : memref<64x32xf32, #tpu.memory_space<vmem>>, vector<8x32xf32>
    %25 = arith.addf %23, %24 : vector<8x32xf32>
    %c24_27 = arith.constant 24 : index
    %c0_28 = arith.constant 0 : index
    %26 = vector.load %arg9[%c24_27, %c0_28] : memref<32x32xf32, #tpu.memory_space<vmem>>, vector<8x32xf32>
    tpu.vector_store %arg9[%c24_27, %c0_28], %25 {strides = array<i32>} : memref<32x32xf32, #tpu.memory_space<vmem>>, vector<8x32xf32>,
    %c0_29 = arith.constant 0 : index
    %c0_30 = arith.constant 0 : index
    %27 = vector.load %arg7[%c0_29, %c0_30] : memref<64x32xf32, #tpu.memory_space<vmem>>, vector<56x32xf32>
    %c0_31 = arith.constant 0 : index
    %c0_32 = arith.constant 0 : index
    %c0_33 = arith.constant 0 : index
    %28 = vector.load %arg3[%c0_31, %c0_32, %c0_33] : memref<3x32x32xf32, #tpu.memory_space<vmem>>, vector<1x32x32xf32>
    %29 = vector.shape_cast %28 : vector<1x32x32xf32> to vector<32x32xf32>
    %cst_34 = arith.constant dense<0.000000e+00> : vector<56x32xf32>
    %30 = tpu.matmul %27, %29, %cst_34 {dimension_numbers = #tpu.dot_dimension_numbers<[1], [0], [0], [1], [0, 0, 1, 1], [], []>} : vector<56x32xf32>, vector<32x32xf32>, vector<56x32xf32> -> vector<56x32xf32>
    %c0_35 = arith.constant 0 : index
    %c0_36 = arith.constant 0 : index
    %31 = vector.load %arg8[%c0_35, %c0_36] : memref<64x32xf32, #tpu.memory_space<vmem>>, vector<56x32xf32>
    tpu.vector_store %arg8[%c0_35, %c0_36], %30 {strides = array<i32>} : memref<64x32xf32, #tpu.memory_space<vmem>>, vector<56x32xf32>,
    %c8_37 = arith.constant 8 : index
    %c0_38 = arith.constant 0 : index
    %32 = vector.load %arg7[%c8_37, %c0_38] : memref<64x32xf32, #tpu.memory_space<vmem>>, vector<56x32xf32>
    %c0_39 = arith.constant 0 : index
    %c0_40 = arith.constant 0 : index
    %33 = vector.load %arg8[%c0_39, %c0_40] : memref<64x32xf32, #tpu.memory_space<vmem>>, vector<56x32xf32>
    %34 = arith.addf %32, %33 : vector<56x32xf32>
    %c8_41 = arith.constant 8 : index
    %c0_42 = arith.constant 0 : index
    %35 = vector.load %arg7[%c8_41, %c0_42] : memref<64x32xf32, #tpu.memory_space<vmem>>, vector<56x32xf32>
    tpu.vector_store %arg7[%c8_41, %c0_42], %34 {strides = array<i32>} : memref<64x32xf32, #tpu.memory_space<vmem>>, vector<56x32xf32>,
    %c0_43 = arith.constant 0 : index
    %c0_44 = arith.constant 0 : index
    %36 = vector.load %arg7[%c0_43, %c0_44] : memref<64x32xf32, #tpu.memory_space<vmem>>, vector<48x32xf32>
    %c1 = arith.constant 1 : index
    %c0_45 = arith.constant 0 : index
    %c0_46 = arith.constant 0 : index
    %37 = vector.load %arg3[%c1, %c0_45, %c0_46] : memref<3x32x32xf32, #tpu.memory_space<vmem>>, vector<1x32x32xf32>
    %38 = vector.shape_cast %37 : vector<1x32x32xf32> to vector<32x32xf32>
    %cst_47 = arith.constant dense<0.000000e+00> : vector<48x32xf32>
    %39 = tpu.matmul %36, %38, %cst_47 {dimension_numbers = #tpu.dot_dimension_numbers<[1], [0], [0], [1], [0, 0, 1, 1], [], []>} : vector<48x32xf32>, vector<32x32xf32>, vector<48x32xf32> -> vector<48x32xf32>
    %c0_48 = arith.constant 0 : index
    %c0_49 = arith.constant 0 : index
    %40 = vector.load %arg8[%c0_48, %c0_49] : memref<64x32xf32, #tpu.memory_space<vmem>>, vector<48x32xf32>
    tpu.vector_store %arg8[%c0_48, %c0_49], %39 {strides = array<i32>} : memref<64x32xf32, #tpu.memory_space<vmem>>, vector<48x32xf32>,
    %c16_50 = arith.constant 16 : index
    %c0_51 = arith.constant 0 : index
    %41 = vector.load %arg7[%c16_50, %c0_51] : memref<64x32xf32, #tpu.memory_space<vmem>>, vector<48x32xf32>
    %c0_52 = arith.constant 0 : index
    %c0_53 = arith.constant 0 : index
    %42 = vector.load %arg8[%c0_52, %c0_53] : memref<64x32xf32, #tpu.memory_space<vmem>>, vector<48x32xf32>
    %43 = arith.addf %41, %42 : vector<48x32xf32>
    %c16_54 = arith.constant 16 : index
    %c0_55 = arith.constant 0 : index
    %44 = vector.load %arg7[%c16_54, %c0_55] : memref<64x32xf32, #tpu.memory_space<vmem>>, vector<48x32xf32>
    tpu.vector_store %arg7[%c16_54, %c0_55], %43 {strides = array<i32>} : memref<64x32xf32, #tpu.memory_space<vmem>>, vector<48x32xf32>,
    %c0_56 = arith.constant 0 : index
    %c0_57 = arith.constant 0 : index
    %45 = vector.load %arg9[%c0_56, %c0_57] : memref<32x32xf32, #tpu.memory_space<vmem>>, vector<32x32xf32>
    %c0_58 = arith.constant 0 : index
    %c0_59 = arith.constant 0 : index
    %46 = vector.load %arg7[%c0_58, %c0_59] : memref<64x32xf32, #tpu.memory_space<vmem>>, vector<32x32xf32>
    tpu.vector_store %arg7[%c0_58, %c0_59], %45 {strides = array<i32>} : memref<64x32xf32, #tpu.memory_space<vmem>>, vector<32x32xf32>,
    %c0_60 = arith.constant 0 : index
    %c0_61 = arith.constant 0 : index
    %47 = vector.load %arg9[%c0_60, %c0_61] : memref<32x32xf32, #tpu.memory_space<vmem>>, vector<32x32xf32>
    %c1_i32 = arith.constant 1 : i32
    %c32_i32 = arith.constant 32 : i32
    %48 = arith.muli %c1_i32, %c32_i32 : i32
    %49 = tpu.assume_multiple %48, 32 : i32
    %c2 = arith.constant 2 : index
    %c0_62 = arith.constant 0 : index
    %c0_63 = arith.constant 0 : index
    %50 = vector.load %arg3[%c2, %c0_62, %c0_63] : memref<3x32x32xf32, #tpu.memory_space<vmem>>, vector<1x32x32xf32>
    %51 = vector.shape_cast %50 : vector<1x32x32xf32> to vector<32x32xf32>
    %cst_64 = arith.constant dense<0.000000e+00> : vector<32x32xf32>
    %52 = tpu.matmul %47, %51, %cst_64 {dimension_numbers = #tpu.dot_dimension_numbers<[1], [0], [0], [1], [0, 0, 1, 1], [], []>} : vector<32x32xf32>, vector<32x32xf32>, vector<32x32xf32> -> vector<32x32xf32>
    %53 = arith.index_cast %49 : i32 to index
    %c0_65 = arith.constant 0 : index
    %54 = vector.load %arg7[%53, %c0_65] : memref<64x32xf32, #tpu.memory_space<vmem>>, vector<32x32xf32>
    %55 = arith.addf %52, %54 : vector<32x32xf32>
    %56 = arith.index_cast %49 : i32 to index
    %c0_66 = arith.constant 0 : index
    %57 = vector.load %arg7[%56, %c0_66] : memref<64x32xf32, #tpu.memory_space<vmem>>, vector<32x32xf32>
    tpu.vector_store %arg7[%56, %c0_66], %55 {strides = array<i32>} : memref<64x32xf32, #tpu.memory_space<vmem>>, vector<32x32xf32>,
    %c1_i32_67 = arith.constant 1 : i32
    %58 = vector.extract_strided_slice %55 {offsets = [24, 0], sizes = [8, 32], strides = [1, 1]} : vector<32x32xf32> to vector<8x32xf32>
    %c0_68 = arith.constant 0 : index
    %c0_69 = arith.constant 0 : index
    %59 = vector.load %arg10[%c0_68, %c0_69] : memref<8x32xf32, #tpu.memory_space<vmem>>, vector<8x32xf32>
    tpu.vector_store %arg10[%c0_68, %c0_69], %58 {strides = array<i32>} : memref<8x32xf32, #tpu.memory_space<vmem>>, vector<8x32xf32>,
    %c0_70 = arith.constant 0 : index
    %c0_71 = arith.constant 0 : index
    %60 = vector.load %arg7[%c0_70, %c0_71] : memref<64x32xf32, #tpu.memory_space<vmem>>, vector<64x32xf32>
    %c0_72 = arith.constant 0 : index
    %c0_73 = arith.constant 0 : index
    %61 = vector.load %arg5[%c0_72, %c0_73] : memref<32x128xf32, #tpu.memory_space<vmem>>, vector<32x128xf32>
    %cst_74 = arith.constant dense<0.000000e+00> : vector<64x128xf32>
    %62 = tpu.matmul %60, %61, %cst_74 {dimension_numbers = #tpu.dot_dimension_numbers<[1], [0], [0], [1], [0, 0, 1, 1], [], []>} : vector<64x32xf32>, vector<32x128xf32>, vector<64x128xf32> -> vector<64x128xf32>
    %c0_75 = arith.constant 0 : index
    %c0_76 = arith.constant 0 : index
    %c0_77 = arith.constant 0 : index
    %63 = vector.load %arg6[%c0_75, %c0_76, %c0_77] : memref<1x64x128xf32, #tpu.memory_space<vmem>>, vector<1x64x128xf32>
    %64 = vector.shape_cast %63 : vector<1x64x128xf32> to vector<64x128xf32>
    %65 = vector.shape_cast %62 : vector<64x128xf32> to vector<1x64x128xf32>
    tpu.vector_store %arg6[%c0_75, %c0_76, %c0_77], %65 {strides = array<i32>} : memref<1x64x128xf32, #tpu.memory_space<vmem>>, vector<1x64x128xf32>,
    return
  }
  func.func @transform_0(%arg0: i32, %arg1: i32) -> (i32, i32, i32) {
    %c0_i32 = arith.constant 0 : i32
    %c0_i32_0 = arith.constant 0 : i32
    return %arg0, %arg1, %c0_i32 : i32, i32, i32
  }
  func.func @transform_1(%arg0: i32, %arg1: i32) -> (i32, i32, i32) {
    %c0_i32 = arith.constant 0 : i32
    %c0_i32_0 = arith.constant 0 : i32
    %c0_i32_1 = arith.constant 0 : i32
    %c0_i32_2 = arith.constant 0 : i32
    return %c0_i32, %c0_i32_0, %c0_i32_1 : i32, i32, i32
  }
  func.func @transform_2(%arg0: i32, %arg1: i32) -> (i32, i32) {
    %c0_i32 = arith.constant 0 : i32
    %c0_i32_0 = arith.constant 0 : i32
    %c0_i32_1 = arith.constant 0 : i32
    return %c0_i32, %c0_i32_0 : i32, i32
  }
  func.func @transform_3(%arg0: i32, %arg1: i32) -> (i32, i32) {
    %c0_i32 = arith.constant 0 : i32
    %c0_i32_0 = arith.constant 0 : i32
    %c0_i32_1 = arith.constant 0 : i32
    return %c0_i32, %c0_i32_0 : i32, i32
  }
  func.func @transform_4(%arg0: i32, %arg1: i32) -> (i32, i32, i32) {
    %c0_i32 = arith.constant 0 : i32
    %c0_i32_0 = arith.constant 0 : i32
    return %arg0, %arg1, %c0_i32 : i32, i32, i32
  }
}

</mosaic_0001>

<llo_original>
// kernel: tpu_custom_call.1
$region0: #{tpu_custom_call.1}
  #allocation0 [shape = 'u32[]', space=smem, size = 0x4, offset = 0x4, fixed_abs, tag = 'smem constant byte address 0x4 - core index']
  #allocation1 [shape = 'u32[144,128]{1,0:T(1,128)}', space=vmem, size = 0x12000, scoped, tag = 'internal scratch']
  #allocation2 [shape = 'f32[64,32]{1,0:T(8,128)}', space=vmem, size = 0x8000, scoped, tag = 'scratch operand']
  #allocation3 [shape = 'f32[64,32]{1,0:T(8,128)}', space=vmem, size = 0x8000, scoped, tag = 'scratch operand']
  #allocation4 [shape = 'f32[32,32]{1,0:T(8,128)}', space=vmem, size = 0x4000, scoped, tag = 'scratch operand']
  #allocation5 [shape = 'f32[8,32]{1,0:T(8,128)}', space=vmem, size = 0x1000, scoped, tag = 'scratch operand']
  %s0 = inlined_call_operand.vmem [shape: f32[1,64,16], index: 0, kind: input, shape index: {}]
  %s1 = inlined_call_operand.hbm [shape: f32[3,32,32], index: 1, kind: input, shape index: {}]
  %s2 = inlined_call_operand.vmem [shape: f32[16,32], index: 2, kind: input, shape index: {}]
  %s3 = inlined_call_operand.vmem [shape: f32[32,128], index: 3, kind: input, shape index: {}]
  %s4 = inlined_call_operand.hbm [shape: f32[1,64,128], index: 4, kind: output, shape index: {}]
  %s5 = sld [smem:[#allocation0]]
  $region34: #{tpu_custom_call.1} parent=0
    _
  %s7 = ssub.s32 1, %s5
  %s8 = scalar_select 0, %s7, %s5
  $region1: #{tpu_custom_call.1} parent=0
    #allocation6 [shape = 'u8[49152]{0}', space=vmem, size = 0xc000, scoped, tag = 'input window, operand 1, single buffered']
    #allocation7 [shape = 's32[1]{0}', space=sflag, size = 0x4, scoped, tag = 'scoped memory for tpu_custom_call.1']
    #allocation8 [shape = 's32[1]{0}', space=sflag, size = 0x4, scoped, tag = 'scoped memory for tpu_custom_call.1']
    #allocation9 [shape = 'u8[32768]{0}', space=vmem, size = 0x8000, scoped, tag = 'output window, operand 0, single buffered']
    %9 = vsyncpa [#allocation7], 0
    %10 = vsyncpa [#allocation8], 0
    // Predicated region
    $region2: #{tpu_custom_call.1} parent=1 // pred_check
      _
    $region3: #{tpu_custom_call.1} parent=1 // pred_check_branch
      %12 = sbr.rel (0) target = $region5
    $region4: #{tpu_custom_call.1} parent=1 // pred_region
      _
    $region5: #{tpu_custom_call.1} parent=1 // pred_fallthru
      _
    // Predicated region
    $region6: #{tpu_custom_call.1} parent=1 // pred_check
      _
    $region7: #{tpu_custom_call.1} parent=1 // pred_check_branch
      %14 = sbr.rel (0) target = $region9
    $region8: #{tpu_custom_call.1} parent=1 // pred_region
      %s16 = ssub.s32 1536, 1536
      %17 = vsyncadd [#allocation7], %s16
      %s18 = sshll.u32 [#allocation6], 4
      %s19 = int_to_ptr.vmem [resolvable:$true] %s18
      %24 = dma.hbm_to_vmem [thread:$0]  %s1, 1536, %s19, [#allocation7], 128, 128, 8
    $region9: #{tpu_custom_call.1} parent=1 // pred_fallthru
      _
    // Predicated region
    $region10: #{tpu_custom_call.1} parent=1 // pred_check
      _
    $region11: #{tpu_custom_call.1} parent=1 // pred_check_branch
      %26 = sbr.rel (0) target = $region13
    $region12: #{tpu_custom_call.1} parent=1 // pred_region
      _
    $region13: #{tpu_custom_call.1} parent=1 // pred_fallthru
      _
    // Predicated region
    $region14: #{tpu_custom_call.1} parent=1 // pred_check
      _
    $region15: #{tpu_custom_call.1} parent=1 // pred_check_branch
      %28 = sbr.rel (0) target = $region17
    $region16: #{tpu_custom_call.1} parent=1 // pred_region
      _
    $region17: #{tpu_custom_call.1} parent=1 // pred_fallthru
      _
    // Predicated region
    $region18: #{tpu_custom_call.1} parent=1 // pred_check
      _
    $region19: #{tpu_custom_call.1} parent=1 // pred_check_branch
      %30 = sbr.rel (0) target = $region21
    $region20: #{tpu_custom_call.1} parent=1 // pred_region
      %31 = dma.done [#allocation7], 1536
    $region21: #{tpu_custom_call.1} parent=1 // pred_fallthru
      _
    %p32 = scmp.eq.s32.totalorder 0, 0
    // Predicated region
    $region22: #{tpu_custom_call.1} parent=1 // pred_check
      %p33 = pneg %p32
    $region23: #{tpu_custom_call.1} parent=1 // pred_check_branch
      %35 = sbr.rel (%p33) target = $region25
    $region24: #{tpu_custom_call.1} parent=1 // pred_region
      %vm36 = vcmask 261120
      %37 = vst.msk [vmem:[#allocation5] sm:$0xff] %vm36, 0.0
    $region25: #{tpu_custom_call.1} parent=1 // pred_fallthru
      _
    %v38 = vld [vmem:[%s0] sm:$0xff]
    %v39 = vld [vmem:[%s0 + $0x8] sm:$0xff]
    %v40 = vld [vmem:[%s0 + $0x10] sm:$0xff]
    %v41 = vld [vmem:[%s0 + $0x18] sm:$0xff]
    %v42 = vld [vmem:[%s0 + $0x20] sm:$0xff]
    %v43 = vld [vmem:[%s0 + $0x28] sm:$0xff]
    %v44 = vld [vmem:[%s0 + $0x30] sm:$0xff]
    %v45 = vld [vmem:[%s0 + $0x38] sm:$0xff]
    %v46 = vld [vmem:[%s2] sm:$0xff]
    %v47 = vld [vmem:[%s2 + $0x8] sm:$0xff]
    %vm48 = vcmask 130048
    %v50 = vsel %vm48, %v38, 0
    %v53 = vsel %vm48, %v39, 0
    %v56 = vsel %vm48, %v40, 0
    %v59 = vsel %vm48, %v41, 0
    %v62 = vsel %vm48, %v42, 0
    %v65 = vsel %vm48, %v43, 0
    %v68 = vsel %vm48, %v44, 0
    %v71 = vsel %vm48, %v45, 0
    %73 = vmatprep.subr.mxu0 0.0
    %74 = vmatpush1.msra.mxu0 %v46
    %75 = vmatprep.subr.mxu0 0.0
    %76 = vmatpush1.msra.mxu0 %v47
    %77 = vmatprep.subr.mxu0 0.0
    %78 = vmatpush1.msra.mxu0 0.0
    %79 = vmatprep.subr.mxu0 0.0
    %80 = vmatpush1.msra.mxu0 0.0
    %81 = vmatprep.subr.mxu0 0.0
    %82 = vmatpush1.msra.mxu0 0.0
    %83 = vmatprep.subr.mxu0 0.0
    %84 = vmatpush1.msra.mxu0 0.0
    %85 = vmatprep.subr.mxu0 0.0
    %86 = vmatpush1.msra.mxu0 0.0
    %87 = vmatprep.subr.mxu0 0.0
    %88 = vmatpush1.msra.mxu0 0.0
    %89 = vmatprep.subr.mxu0 0.0
    %90 = vmatpush1.msra.mxu0 0.0
    %91 = vmatprep.subr.mxu0 0.0
    %92 = vmatpush1.msra.mxu0 0.0
    %93 = vmatprep.subr.mxu0 0.0
    %94 = vmatpush1.msra.mxu0 0.0
    %95 = vmatprep.subr.mxu0 0.0
    %96 = vmatpush1.msra.mxu0 0.0
    %97 = vmatprep.subr.mxu0 0.0
    %98 = vmatpush1.msra.mxu0 0.0
    %99 = vmatprep.subr.mxu0 0.0
    %100 = vmatpush1.msra.mxu0 0.0
    %101 = vmatprep.subr.mxu0 0.0
    %102 = vmatpush1.msra.mxu0 0.0
    %103 = vmatprep.subr.mxu0 0.0
    %104 = vmatpush1.msra.mxu0 0.0
    %105 = vmatprep.subr.mxu0 0.0
    %106 = vmatpush1.msra.mxu0 0.0
    %107 = vmatprep.subr.mxu0 0.0
    %108 = vmatpush1.msra.mxu0 0.0
    %109 = vmatprep.subr.mxu0 0.0
    %110 = vmatpush1.msra.mxu0 0.0
    %111 = vmatprep.subr.mxu0 0.0
    %112 = vmatpush1.msra.mxu0 0.0
    %113 = vmatprep.subr.mxu0 0.0
    %114 = vmatpush1.msra.mxu0 0.0
    %115 = vmatprep.subr.mxu0 0.0
    %116 = vmatpush1.msra.mxu0 0.0
    %117 = vmatprep.subr.mxu0 0.0
    %118 = vmatpush1.msra.mxu0 0.0
    %119 = vmatprep.subr.mxu0 0.0
    %120 = vmatpush1.msra.mxu0 0.0
    %121 = vmatprep.subr.mxu0 0.0
    %122 = vmatpush1.msra.mxu0 0.0
    %123 = vmatprep.subr.mxu0 0.0
    %124 = vmatpush1.msra.mxu0 0.0
    %125 = vmatprep.subr.mxu0 0.0
    %126 = vmatpush1.msra.mxu0 0.0
    %127 = vmatprep.subr.mxu0 0.0
    %128 = vmatpush1.msra.mxu0 0.0
    %129 = vmatprep.subr.mxu0 0.0
    %130 = vmatpush1.msra.mxu0 0.0
    %131 = vmatprep.subr.mxu0 0.0
    %132 = vmatpush1.msra.mxu0 0.0
    %133 = vmatprep.subr.mxu0 0.0
    %134 = vmatpush1.msra.mxu0 0.0
    %135 = vmatprep.subr.mxu0 0.0
    %136 = vmatpush1.msra.mxu0 0.0
    %137 = vmatprep.mubr.f32.mxu0 0.0
    %138 = vmatmul.mubr.f32.gmra.mrb[0].mxu0 %v50
    %v139 = vpop.f32.mrb[0].mxu0
    %v140 = vadd.f32 0.0, %v139
    %v141 = vpop.f32.mrb[0].mxu0
    %142 = vmatprep.mubr.f32.mxu0 0.0
    %143 = vmatmul.mubr.f32.gmra.mrb[0].mxu0 %v53
    %v144 = vpop.f32.mrb[0].mxu0
    %v145 = vadd.f32 0.0, %v144
    %v146 = vpop.f32.mrb[0].mxu0
    %147 = vmatprep.mubr.f32.mxu0 0.0
    %148 = vmatmul.mubr.f32.gmra.mrb[0].mxu0 %v56
    %v149 = vpop.f32.mrb[0].mxu0
    %v150 = vadd.f32 0.0, %v149
    %v151 = vpop.f32.mrb[0].mxu0
    %152 = vmatprep.mubr.f32.mxu0 0.0
    %153 = vmatmul.mubr.f32.gmra.mrb[0].mxu0 %v59
    %v154 = vpop.f32.mrb[0].mxu0
    %v155 = vadd.f32 0.0, %v154
    %v156 = vpop.f32.mrb[0].mxu0
    %157 = vmatprep.mubr.f32.mxu0 0.0
    %158 = vmatmul.mubr.f32.gmra.mrb[0].mxu0 %v62
    %v159 = vpop.f32.mrb[0].mxu0
    %v160 = vadd.f32 0.0, %v159
    %v161 = vpop.f32.mrb[0].mxu0
    %162 = vmatprep.mubr.f32.mxu0 0.0
    %163 = vmatmul.mubr.f32.gmra.mrb[0].mxu0 %v65
    %v164 = vpop.f32.mrb[0].mxu0
    %v165 = vadd.f32 0.0, %v164
    %v166 = vpop.f32.mrb[0].mxu0
    %167 = vmatprep.mubr.f32.mxu0 0.0
    %168 = vmatmul.mubr.f32.gmra.mrb[0].mxu0 %v68
    %v169 = vpop.f32.mrb[0].mxu0
    %v170 = vadd.f32 0.0, %v169
    %v171 = vpop.f32.mrb[0].mxu0
    %172 = vmatprep.mubr.f32.mxu0 0.0
    %173 = vmatmul.mubr.f32.gmra.mrb[0].mxu0 %v71
    %v174 = vpop.f32.mrb[0].mxu0
    %v175 = vadd.f32 0.0, %v174
    %v176 = vpop.f32.mrb[0].mxu0
    %177 = vdwg.mxu0
    %vm178 = vcmask 261120
    %179 = vst.msk [vmem:[#allocation2] sm:$0xff] %vm178, %v140
    %180 = vst.msk [vmem:[#allocation2 + $0x8] sm:$0xff] %vm178, %v145
    %181 = vst.msk [vmem:[#allocation2 + $0x10] sm:$0xff] %vm178, %v150
    %182 = vst.msk [vmem:[#allocation2 + $0x18] sm:$0xff] %vm178, %v155
    %183 = vst.msk [vmem:[#allocation2 + $0x20] sm:$0xff] %vm178, %v160
    %184 = vst.msk [vmem:[#allocation2 + $0x28] sm:$0xff] %vm178, %v165
    %185 = vst.msk [vmem:[#allocation2 + $0x30] sm:$0xff] %vm178, %v170
    %186 = vst.msk [vmem:[#allocation2 + $0x38] sm:$0xff] %vm178, %v175
    %v187 = vld [vmem:[#allocation6] sm:$0xff]
    %v188 = vld [vmem:[#allocation6 + $0x8] sm:$0xff]
    %v189 = vld [vmem:[#allocation6 + $0x10] sm:$0xff]
    %v190 = vld [vmem:[#allocation6 + $0x18] sm:$0xff]
    %v191 = vld [vmem:[#allocation5] sm:$0xff]
    %v192 = vld [vmem:[#allocation2] sm:$0xff]
    %v194 = vsel %vm178, %v191, 0
    %196 = vmatprep.subr.mxu0 0.0
    %197 = vmatpush1.msra.mxu0 %v187
    %198 = vmatprep.subr.mxu0 0.0
    %199 = vmatpush1.msra.mxu0 %v188
    %200 = vmatprep.subr.mxu0 0.0
    %201 = vmatpush1.msra.mxu0 %v189
    %202 = vmatprep.subr.mxu0 0.0
    %203 = vmatpush1.msra.mxu0 %v190
    %204 = vmatprep.subr.mxu0 0.0
    %205 = vmatpush1.msra.mxu0 0.0
    %206 = vmatprep.subr.mxu0 0.0
    %207 = vmatpush1.msra.mxu0 0.0
    %208 = vmatprep.subr.mxu0 0.0
    %209 = vmatpush1.msra.mxu0 0.0
    %210 = vmatprep.subr.mxu0 0.0
    %211 = vmatpush1.msra.mxu0 0.0
    %212 = vmatprep.subr.mxu0 0.0
    %213 = vmatpush1.msra.mxu0 0.0
    %214 = vmatprep.subr.mxu0 0.0
    %215 = vmatpush1.msra.mxu0 0.0
    %216 = vmatprep.subr.mxu0 0.0
    %217 = vmatpush1.msra.mxu0 0.0
    %218 = vmatprep.subr.mxu0 0.0
    %219 = vmatpush1.msra.mxu0 0.0
    %220 = vmatprep.subr.mxu0 0.0
    %221 = vmatpush1.msra.mxu0 0.0
    %222 = vmatprep.subr.mxu0 0.0
    %223 = vmatpush1.msra.mxu0 0.0
    %224 = vmatprep.subr.mxu0 0.0
    %225 = vmatpush1.msra.mxu0 0.0
    %226 = vmatprep.subr.mxu0 0.0
    %227 = vmatpush1.msra.mxu0 0.0
    %228 = vmatprep.subr.mxu0 0.0
    %229 = vmatpush1.msra.mxu0 0.0
    %230 = vmatprep.subr.mxu0 0.0
    %231 = vmatpush1.msra.mxu0 0.0
    %232 = vmatprep.subr.mxu0 0.0
    %233 = vmatpush1.msra.mxu0 0.0
    %234 = vmatprep.subr.mxu0 0.0
    %235 = vmatpush1.msra.mxu0 0.0
    %236 = vmatprep.subr.mxu0 0.0
    %237 = vmatpush1.msra.mxu0 0.0
    %238 = vmatprep.subr.mxu0 0.0
    %239 = vmatpush1.msra.mxu0 0.0
    %240 = vmatprep.subr.mxu0 0.0
    %241 = vmatpush1.msra.mxu0 0.0
    %242 = vmatprep.subr.mxu0 0.0
    %243 = vmatpush1.msra.mxu0 0.0
    %244 = vmatprep.subr.mxu0 0.0
    %245 = vmatpush1.msra.mxu0 0.0
    %246 = vmatprep.subr.mxu0 0.0
    %247 = vmatpush1.msra.mxu0 0.0
    %248 = vmatprep.subr.mxu0 0.0
    %249 = vmatpush1.msra.mxu0 0.0
    %250 = vmatprep.subr.mxu0 0.0
    %251 = vmatpush1.msra.mxu0 0.0
    %252 = vmatprep.subr.mxu0 0.0
    %253 = vmatpush1.msra.mxu0 0.0
    %254 = vmatprep.subr.mxu0 0.0
    %255 = vmatpush1.msra.mxu0 0.0
    %256 = vmatprep.subr.mxu0 0.0
    %257 = vmatpush1.msra.mxu0 0.0
    %258 = vmatprep.subr.mxu0 0.0
    %259 = vmatpush1.msra.mxu0 0.0
    %260 = vmatprep.mubr.f32.mxu0 0.0
    %261 = vmatmul.mubr.f32.gmra.mrb[0].mxu0 %v194
    %v262 = vpop.f32.mrb[0].mxu0
    %v263 = vadd.f32 %v192, %v262
    %v264 = vpop.f32.mrb[0].mxu0
    %265 = vdwg.mxu0
    %266 = vst.msk [vmem:[#allocation4] sm:$0xff] %vm178, %v263
    %v267 = vld [vmem:[#allocation2 + $0x8] sm:$0xff]
    %v269 = vsel %vm178, %v263, 0
    %271 = vmatprep.subr.mxu0 0.0
    %272 = vmatpush1.msra.mxu0 %v187
    %273 = vmatprep.subr.mxu0 0.0
    %274 = vmatpush1.msra.mxu0 %v188
    %275 = vmatprep.subr.mxu0 0.0
    %276 = vmatpush1.msra.mxu0 %v189
    %277 = vmatprep.subr.mxu0 0.0
    %278 = vmatpush1.msra.mxu0 %v190
    %279 = vmatprep.subr.mxu0 0.0
    %280 = vmatpush1.msra.mxu0 0.0
    %281 = vmatprep.subr.mxu0 0.0
    %282 = vmatpush1.msra.mxu0 0.0
    %283 = vmatprep.subr.mxu0 0.0
    %284 = vmatpush1.msra.mxu0 0.0
    %285 = vmatprep.subr.mxu0 0.0
    %286 = vmatpush1.msra.mxu0 0.0
    %287 = vmatprep.subr.mxu0 0.0
    %288 = vmatpush1.msra.mxu0 0.0
    %289 = vmatprep.subr.mxu0 0.0
    %290 = vmatpush1.msra.mxu0 0.0
    %291 = vmatprep.subr.mxu0 0.0
    %292 = vmatpush1.msra.mxu0 0.0
    %293 = vmatprep.subr.mxu0 0.0
    %294 = vmatpush1.msra.mxu0 0.0
    %295 = vmatprep.subr.mxu0 0.0
    %296 = vmatpush1.msra.mxu0 0.0
    %297 = vmatprep.subr.mxu0 0.0
    %298 = vmatpush1.msra.mxu0 0.0
    %299 = vmatprep.subr.mxu0 0.0
    %300 = vmatpush1.msra.mxu0 0.0
    %301 = vmatprep.subr.mxu0 0.0
    %302 = vmatpush1.msra.mxu0 0.0
    %303 = vmatprep.subr.mxu0 0.0
    %304 = vmatpush1.msra.mxu0 0.0
    %305 = vmatprep.subr.mxu0 0.0
    %306 = vmatpush1.msra.mxu0 0.0
    %307 = vmatprep.subr.mxu0 0.0
    %308 = vmatpush1.msra.mxu0 0.0
    %309 = vmatprep.subr.mxu0 0.0
    %310 = vmatpush1.msra.mxu0 0.0
    %311 = vmatprep.subr.mxu0 0.0
    %312 = vmatpush1.msra.mxu0 0.0
    %313 = vmatprep.subr.mxu0 0.0
    %314 = vmatpush1.msra.mxu0 0.0
    %315 = vmatprep.subr.mxu0 0.0
    %316 = vmatpush1.msra.mxu0 0.0
    %317 = vmatprep.subr.mxu0 0.0
    %318 = vmatpush1.msra.mxu0 0.0
    %319 = vmatprep.subr.mxu0 0.0
    %320 = vmatpush1.msra.mxu0 0.0
    %321 = vmatprep.subr.mxu0 0.0
    %322 = vmatpush1.msra.mxu0 0.0
    %323 = vmatprep.subr.mxu0 0.0
    %324 = vmatpush1.msra.mxu0 0.0
    %325 = vmatprep.subr.mxu0 0.0
    %326 = vmatpush1.msra.mxu0 0.0
    %327 = vmatprep.subr.mxu0 0.0
    %328 = vmatpush1.msra.mxu0 0.0
    %329 = vmatprep.subr.mxu0 0.0
    %330 = vmatpush1.msra.mxu0 0.0
    %331 = vmatprep.subr.mxu0 0.0
    %332 = vmatpush1.msra.mxu0 0.0
    %333 = vmatprep.subr.mxu0 0.0
    %334 = vmatpush1.msra.mxu0 0.0
    %335 = vmatprep.mubr.f32.mxu0 0.0
    %336 = vmatmul.mubr.f32.gmra.mrb[0].mxu0 %v269
    %v337 = vpop.f32.mrb[0].mxu0
    %v338 = vadd.f32 %v267, %v337
    %v339 = vpop.f32.mrb[0].mxu0
    %340 = vdwg.mxu0
    %341 = vst.msk [vmem:[#allocation4 + $0x8] sm:$0xff] %vm178, %v338
    %v342 = vld [vmem:[#allocation2 + $0x10] sm:$0xff]
    %v344 = vsel %vm178, %v338, 0
    %346 = vmatprep.subr.mxu0 0.0
    %347 = vmatpush1.msra.mxu0 %v187
    %348 = vmatprep.subr.mxu0 0.0
    %349 = vmatpush1.msra.mxu0 %v188
    %350 = vmatprep.subr.mxu0 0.0
    %351 = vmatpush1.msra.mxu0 %v189
    %352 = vmatprep.subr.mxu0 0.0
    %353 = vmatpush1.msra.mxu0 %v190
    %354 = vmatprep.subr.mxu0 0.0
    %355 = vmatpush1.msra.mxu0 0.0
    %356 = vmatprep.subr.mxu0 0.0
    %357 = vmatpush1.msra.mxu0 0.0
    %358 = vmatprep.subr.mxu0 0.0
    %359 = vmatpush1.msra.mxu0 0.0
    %360 = vmatprep.subr.mxu0 0.0
    %361 = vmatpush1.msra.mxu0 0.0
    %362 = vmatprep.subr.mxu0 0.0
    %363 = vmatpush1.msra.mxu0 0.0
    %364 = vmatprep.subr.mxu0 0.0
    %365 = vmatpush1.msra.mxu0 0.0
    %366 = vmatprep.subr.mxu0 0.0
    %367 = vmatpush1.msra.mxu0 0.0
    %368 = vmatprep.subr.mxu0 0.0
    %369 = vmatpush1.msra.mxu0 0.0
    %370 = vmatprep.subr.mxu0 0.0
    %371 = vmatpush1.msra.mxu0 0.0
    %372 = vmatprep.subr.mxu0 0.0
    %373 = vmatpush1.msra.mxu0 0.0
    %374 = vmatprep.subr.mxu0 0.0
    %375 = vmatpush1.msra.mxu0 0.0
    %376 = vmatprep.subr.mxu0 0.0
    %377 = vmatpush1.msra.mxu0 0.0
    %378 = vmatprep.subr.mxu0 0.0
    %379 = vmatpush1.msra.mxu0 0.0
    %380 = vmatprep.subr.mxu0 0.0
    %381 = vmatpush1.msra.mxu0 0.0
    %382 = vmatprep.subr.mxu0 0.0
    %383 = vmatpush1.msra.mxu0 0.0
    %384 = vmatprep.subr.mxu0 0.0
    %385 = vmatpush1.msra.mxu0 0.0
    %386 = vmatprep.subr.mxu0 0.0
    %387 = vmatpush1.msra.mxu0 0.0
    %388 = vmatprep.subr.mxu0 0.0
    %389 = vmatpush1.msra.mxu0 0.0
    %390 = vmatprep.subr.mxu0 0.0
    %391 = vmatpush1.msra.mxu0 0.0
    %392 = vmatprep.subr.mxu0 0.0
    %393 = vmatpush1.msra.mxu0 0.0
    %394 = vmatprep.subr.mxu0 0.0
    %395 = vmatpush1.msra.mxu0 0.0
    %396 = vmatprep.subr.mxu0 0.0
    %397 = vmatpush1.msra.mxu0 0.0
    %398 = vmatprep.subr.mxu0 0.0
    %399 = vmatpush1.msra.mxu0 0.0
    %400 = vmatprep.subr.mxu0 0.0
    %401 = vmatpush1.msra.mxu0 0.0
    %402 = vmatprep.subr.mxu0 0.0
    %403 = vmatpush1.msra.mxu0 0.0
    %404 = vmatprep.subr.mxu0 0.0
    %405 = vmatpush1.msra.mxu0 0.0
    %406 = vmatprep.subr.mxu0 0.0
    %407 = vmatpush1.msra.mxu0 0.0
    %408 = vmatprep.subr.mxu0 0.0
    %409 = vmatpush1.msra.mxu0 0.0
    %410 = vmatprep.mubr.f32.mxu0 0.0
    %411 = vmatmul.mubr.f32.gmra.mrb[0].mxu0 %v344
    %v412 = vpop.f32.mrb[0].mxu0
    %v413 = vadd.f32 %v342, %v412
    %v414 = vpop.f32.mrb[0].mxu0
    %415 = vdwg.mxu0
    %416 = vst.msk [vmem:[#allocation4 + $0x10] sm:$0xff] %vm178, %v413
    %v417 = vld [vmem:[#allocation2 + $0x18] sm:$0xff]
    %v419 = vsel %vm178, %v413, 0
    %421 = vmatprep.subr.mxu0 0.0
    %422 = vmatpush1.msra.mxu0 %v187
    %423 = vmatprep.subr.mxu0 0.0
    %424 = vmatpush1.msra.mxu0 %v188
    %425 = vmatprep.subr.mxu0 0.0
    %426 = vmatpush1.msra.mxu0 %v189
    %427 = vmatprep.subr.mxu0 0.0
    %428 = vmatpush1.msra.mxu0 %v190
    %429 = vmatprep.subr.mxu0 0.0
    %430 = vmatpush1.msra.mxu0 0.0
    %431 = vmatprep.subr.mxu0 0.0
    %432 = vmatpush1.msra.mxu0 0.0
    %433 = vmatprep.subr.mxu0 0.0
    %434 = vmatpush1.msra.mxu0 0.0
    %435 = vmatprep.subr.mxu0 0.0
    %436 = vmatpush1.msra.mxu0 0.0
    %437 = vmatprep.subr.mxu0 0.0
    %438 = vmatpush1.msra.mxu0 0.0
    %439 = vmatprep.subr.mxu0 0.0
    %440 = vmatpush1.msra.mxu0 0.0
    %441 = vmatprep.subr.mxu0 0.0
    %442 = vmatpush1.msra.mxu0 0.0
    %443 = vmatprep.subr.mxu0 0.0
    %444 = vmatpush1.msra.mxu0 0.0
    %445 = vmatprep.subr.mxu0 0.0
    %446 = vmatpush1.msra.mxu0 0.0
    %447 = vmatprep.subr.mxu0 0.0
    %448 = vmatpush1.msra.mxu0 0.0
    %449 = vmatprep.subr.mxu0 0.0
    %450 = vmatpush1.msra.mxu0 0.0
    %451 = vmatprep.subr.mxu0 0.0
    %452 = vmatpush1.msra.mxu0 0.0
    %453 = vmatprep.subr.mxu0 0.0
    %454 = vmatpush1.msra.mxu0 0.0
    %455 = vmatprep.subr.mxu0 0.0
    %456 = vmatpush1.msra.mxu0 0.0
    %457 = vmatprep.subr.mxu0 0.0
    %458 = vmatpush1.msra.mxu0 0.0
    %459 = vmatprep.subr.mxu0 0.0
    %460 = vmatpush1.msra.mxu0 0.0
    %461 = vmatprep.subr.mxu0 0.0
    %462 = vmatpush1.msra.mxu0 0.0
    %463 = vmatprep.subr.mxu0 0.0
    %464 = vmatpush1.msra.mxu0 0.0
    %465 = vmatprep.subr.mxu0 0.0
    %466 = vmatpush1.msra.mxu0 0.0
    %467 = vmatprep.subr.mxu0 0.0
    %468 = vmatpush1.msra.mxu0 0.0
    %469 = vmatprep.subr.mxu0 0.0
    %470 = vmatpush1.msra.mxu0 0.0
    %471 = vmatprep.subr.mxu0 0.0
    %472 = vmatpush1.msra.mxu0 0.0
    %473 = vmatprep.subr.mxu0 0.0
    %474 = vmatpush1.msra.mxu0 0.0
    %475 = vmatprep.subr.mxu0 0.0
    %476 = vmatpush1.msra.mxu0 0.0
    %477 = vmatprep.subr.mxu0 0.0
    %478 = vmatpush1.msra.mxu0 0.0
    %479 = vmatprep.subr.mxu0 0.0
    %480 = vmatpush1.msra.mxu0 0.0
    %481 = vmatprep.subr.mxu0 0.0
    %482 = vmatpush1.msra.mxu0 0.0
    %483 = vmatprep.subr.mxu0 0.0
    %484 = vmatpush1.msra.mxu0 0.0
    %485 = vmatprep.mubr.f32.mxu0 0.0
    %486 = vmatmul.mubr.f32.gmra.mrb[0].mxu0 %v419
    %v487 = vpop.f32.mrb[0].mxu0
    %v488 = vadd.f32 %v417, %v487
    %v489 = vpop.f32.mrb[0].mxu0
    %490 = vdwg.mxu0
    %491 = vst.msk [vmem:[#allocation4 + $0x18] sm:$0xff] %vm178, %v488
    %v492 = vld [vmem:[#allocation2] sm:$0xff]
    %v493 = vld [vmem:[#allocation2 + $0x8] sm:$0xff]
    %v494 = vld [vmem:[#allocation2 + $0x10] sm:$0xff]
    %v495 = vld [vmem:[#allocation2 + $0x18] sm:$0xff]
    %v496 = vld [vmem:[#allocation2 + $0x20] sm:$0xff]
    %v497 = vld [vmem:[#allocation2 + $0x28] sm:$0xff]
    %v498 = vld [vmem:[#allocation2 + $0x30] sm:$0xff]
    %v499 = vld [vmem:[#allocation6] sm:$0xff]
    %v500 = vld [vmem:[#allocation6 + $0x8] sm:$0xff]
    %v501 = vld [vmem:[#allocation6 + $0x10] sm:$0xff]
    %v502 = vld [vmem:[#allocation6 + $0x18] sm:$0xff]
    %v504 = vsel %vm178, %v492, 0
    %v507 = vsel %vm178, %v493, 0
    %v510 = vsel %vm178, %v494, 0
    %v513 = vsel %vm178, %v495, 0
    %v516 = vsel %vm178, %v496, 0
    %v519 = vsel %vm178, %v497, 0
    %v522 = vsel %vm178, %v498, 0
    %524 = vmatprep.subr.mxu0 0.0
    %525 = vmatpush1.msra.mxu0 %v499
    %526 = vmatprep.subr.mxu0 0.0
    %527 = vmatpush1.msra.mxu0 %v500
    %528 = vmatprep.subr.mxu0 0.0
    %529 = vmatpush1.msra.mxu0 %v501
    %530 = vmatprep.subr.mxu0 0.0
    %531 = vmatpush1.msra.mxu0 %v502
    %532 = vmatprep.subr.mxu0 0.0
    %533 = vmatpush1.msra.mxu0 0.0
    %534 = vmatprep.subr.mxu0 0.0
    %535 = vmatpush1.msra.mxu0 0.0
    %536 = vmatprep.subr.mxu0 0.0
    %537 = vmatpush1.msra.mxu0 0.0
    %538 = vmatprep.subr.mxu0 0.0
    %539 = vmatpush1.msra.mxu0 0.0
    %540 = vmatprep.subr.mxu0 0.0
    %541 = vmatpush1.msra.mxu0 0.0
    %542 = vmatprep.subr.mxu0 0.0
    %543 = vmatpush1.msra.mxu0 0.0
    %544 = vmatprep.subr.mxu0 0.0
    %545 = vmatpush1.msra.mxu0 0.0
    %546 = vmatprep.subr.mxu0 0.0
    %547 = vmatpush1.msra.mxu0 0.0
    %548 = vmatprep.subr.mxu0 0.0
    %549 = vmatpush1.msra.mxu0 0.0
    %550 = vmatprep.subr.mxu0 0.0
    %551 = vmatpush1.msra.mxu0 0.0
    %552 = vmatprep.subr.mxu0 0.0
    %553 = vmatpush1.msra.mxu0 0.0
    %554 = vmatprep.subr.mxu0 0.0
    %555 = vmatpush1.msra.mxu0 0.0
    %556 = vmatprep.subr.mxu0 0.0
    %557 = vmatpush1.msra.mxu0 0.0
    %558 = vmatprep.subr.mxu0 0.0
    %559 = vmatpush1.msra.mxu0 0.0
    %560 = vmatprep.subr.mxu0 0.0
    %561 = vmatpush1.msra.mxu0 0.0
    %562 = vmatprep.subr.mxu0 0.0
    %563 = vmatpush1.msra.mxu0 0.0
    %564 = vmatprep.subr.mxu0 0.0
    %565 = vmatpush1.msra.mxu0 0.0
    %566 = vmatprep.subr.mxu0 0.0
    %567 = vmatpush1.msra.mxu0 0.0
    %568 = vmatprep.subr.mxu0 0.0
    %569 = vmatpush1.msra.mxu0 0.0
    %570 = vmatprep.subr.mxu0 0.0
    %571 = vmatpush1.msra.mxu0 0.0
    %572 = vmatprep.subr.mxu0 0.0
    %573 = vmatpush1.msra.mxu0 0.0
    %574 = vmatprep.subr.mxu0 0.0
    %575 = vmatpush1.msra.mxu0 0.0
    %576 = vmatprep.subr.mxu0 0.0
    %577 = vmatpush1.msra.mxu0 0.0
    %578 = vmatprep.subr.mxu0 0.0
    %579 = vmatpush1.msra.mxu0 0.0
    %580 = vmatprep.subr.mxu0 0.0
    %581 = vmatpush1.msra.mxu0 0.0
    %582 = vmatprep.subr.mxu0 0.0
    %583 = vmatpush1.msra.mxu0 0.0
    %584 = vmatprep.subr.mxu0 0.0
    %585 = vmatpush1.msra.mxu0 0.0
    %586 = vmatprep.subr.mxu0 0.0
    %587 = vmatpush1.msra.mxu0 0.0
    %588 = vmatprep.mubr.f32.mxu0 0.0
    %589 = vmatmul.mubr.f32.gmra.mrb[0].mxu0 %v504
    %v590 = vpop.f32.mrb[0].mxu0
    %v591 = vadd.f32 0.0, %v590
    %v592 = vpop.f32.mrb[0].mxu0
    %593 = vmatprep.mubr.f32.mxu0 0.0
    %594 = vmatmul.mubr.f32.gmra.mrb[0].mxu0 %v507
    %v595 = vpop.f32.mrb[0].mxu0
    %v596 = vadd.f32 0.0, %v595
    %v597 = vpop.f32.mrb[0].mxu0
    %598 = vmatprep.mubr.f32.mxu0 0.0
    %599 = vmatmul.mubr.f32.gmra.mrb[0].mxu0 %v510
    %v600 = vpop.f32.mrb[0].mxu0
    %v601 = vadd.f32 0.0, %v600
    %v602 = vpop.f32.mrb[0].mxu0
    %603 = vmatprep.mubr.f32.mxu0 0.0
    %604 = vmatmul.mubr.f32.gmra.mrb[0].mxu0 %v513
    %v605 = vpop.f32.mrb[0].mxu0
    %v606 = vadd.f32 0.0, %v605
    %v607 = vpop.f32.mrb[0].mxu0
    %608 = vmatprep.mubr.f32.mxu0 0.0
    %609 = vmatmul.mubr.f32.gmra.mrb[0].mxu0 %v516
    %v610 = vpop.f32.mrb[0].mxu0
    %v611 = vadd.f32 0.0, %v610
    %v612 = vpop.f32.mrb[0].mxu0
    %613 = vmatprep.mubr.f32.mxu0 0.0
    %614 = vmatmul.mubr.f32.gmra.mrb[0].mxu0 %v519
    %v615 = vpop.f32.mrb[0].mxu0
    %v616 = vadd.f32 0.0, %v615
    %v617 = vpop.f32.mrb[0].mxu0
    %618 = vmatprep.mubr.f32.mxu0 0.0
    %619 = vmatmul.mubr.f32.gmra.mrb[0].mxu0 %v522
    %v620 = vpop.f32.mrb[0].mxu0
    %v621 = vadd.f32 0.0, %v620
    %v622 = vpop.f32.mrb[0].mxu0
    %623 = vdwg.mxu0
    %624 = vst.msk [vmem:[#allocation3] sm:$0xff] %vm178, %v591
    %625 = vst.msk [vmem:[#allocation3 + $0x8] sm:$0xff] %vm178, %v596
    %626 = vst.msk [vmem:[#allocation3 + $0x10] sm:$0xff] %vm178, %v601
    %627 = vst.msk [vmem:[#allocation3 + $0x18] sm:$0xff] %vm178, %v606
    %628 = vst.msk [vmem:[#allocation3 + $0x20] sm:$0xff] %vm178, %v611
    %629 = vst.msk [vmem:[#allocation3 + $0x28] sm:$0xff] %vm178, %v616
    %630 = vst.msk [vmem:[#allocation3 + $0x30] sm:$0xff] %vm178, %v621
    %v631 = vld [vmem:[#allocation2 + $0x8] sm:$0xff]
    %v632 = vld [vmem:[#allocation2 + $0x10] sm:$0xff]
    %v633 = vld [vmem:[#allocation2 + $0x18] sm:$0xff]
    %v634 = vld [vmem:[#allocation2 + $0x20] sm:$0xff]
    %v635 = vld [vmem:[#allocation2 + $0x28] sm:$0xff]
    %v636 = vld [vmem:[#allocation2 + $0x30] sm:$0xff]
    %v637 = vld [vmem:[#allocation2 + $0x38] sm:$0xff]
    %v638 = vld [vmem:[#allocation3] sm:$0xff]
    %v639 = vld [vmem:[#allocation3 + $0x8] sm:$0xff]
    %v640 = vld [vmem:[#allocation3 + $0x10] sm:$0xff]
    %v641 = vld [vmem:[#allocation3 + $0x18] sm:$0xff]
    %v642 = vld [vmem:[#allocation3 + $0x20] sm:$0xff]
    %v643 = vld [vmem:[#allocation3 + $0x28] sm:$0xff]
    %v644 = vld [vmem:[#allocation3 + $0x30] sm:$0xff]
    %v645 = vadd.f32 %v631, %v638
    %v646 = vadd.f32 %v632, %v639
    %v647 = vadd.f32 %v633, %v640
    %v648 = vadd.f32 %v634, %v641
    %v649 = vadd.f32 %v635, %v642
    %v650 = vadd.f32 %v636, %v643
    %v651 = vadd.f32 %v637, %v644
    %652 = vst.msk [vmem:[#allocation2 + $0x8] sm:$0xff] %vm178, %v645
    %653 = vst.msk [vmem:[#allocation2 + $0x10] sm:$0xff] %vm178, %v646
    %654 = vst.msk [vmem:[#allocation2 + $0x18] sm:$0xff] %vm178, %v647
    %655 = vst.msk [vmem:[#allocation2 + $0x20] sm:$0xff] %vm178, %v648
    %656 = vst.msk [vmem:[#allocation2 + $0x28] sm:$0xff] %vm178, %v649
    %657 = vst.msk [vmem:[#allocation2 + $0x30] sm:$0xff] %vm178, %v650
    %658 = vst.msk [vmem:[#allocation2 + $0x38] sm:$0xff] %vm178, %v651
    %v659 = vld [vmem:[#allocation2] sm:$0xff]
    %v660 = vld [vmem:[#allocation2 + $0x8] sm:$0xff]
    %v661 = vld [vmem:[#allocation2 + $0x10] sm:$0xff]
    %v662 = vld [vmem:[#allocation2 + $0x18] sm:$0xff]
    %v663 = vld [vmem:[#allocation2 + $0x20] sm:$0xff]
    %v664 = vld [vmem:[#allocation2 + $0x28] sm:$0xff]
    %s665 = scalar_lea.vmem [#allocation6], 32
    %v666 = vld [vmem:[%s665] sm:$0xff]
    %v667 = vld [vmem:[%s665 + $0x8] sm:$0xff]
    %v668 = vld [vmem:[%s665 + $0x10] sm:$0xff]
    %v669 = vld [vmem:[%s665 + $0x18] sm:$0xff]
    %v671 = vsel %vm178, %v659, 0
    %v674 = vsel %vm178, %v660, 0
    %v677 = vsel %vm178, %v661, 0
    %v680 = vsel %vm178, %v662, 0
    %v683 = vsel %vm178, %v663, 0
    %v686 = vsel %vm178, %v664, 0
    %688 = vmatprep.subr.mxu0 0.0
    %689 = vmatpush1.msra.mxu0 %v666
    %690 = vmatprep.subr.mxu0 0.0
    %691 = vmatpush1.msra.mxu0 %v667
    %692 = vmatprep.subr.mxu0 0.0
    %693 = vmatpush1.msra.mxu0 %v668
    %694 = vmatprep.subr.mxu0 0.0
    %695 = vmatpush1.msra.mxu0 %v669
    %696 = vmatprep.subr.mxu0 0.0
    %697 = vmatpush1.msra.mxu0 0.0
    %698 = vmatprep.subr.mxu0 0.0
    %699 = vmatpush1.msra.mxu0 0.0
    %700 = vmatprep.subr.mxu0 0.0
    %701 = vmatpush1.msra.mxu0 0.0
    %702 = vmatprep.subr.mxu0 0.0
    %703 = vmatpush1.msra.mxu0 0.0
    %704 = vmatprep.subr.mxu0 0.0
    %705 = vmatpush1.msra.mxu0 0.0
    %706 = vmatprep.subr.mxu0 0.0
    %707 = vmatpush1.msra.mxu0 0.0
    %708 = vmatprep.subr.mxu0 0.0
    %709 = vmatpush1.msra.mxu0 0.0
    %710 = vmatprep.subr.mxu0 0.0
    %711 = vmatpush1.msra.mxu0 0.0
    %712 = vmatprep.subr.mxu0 0.0
    %713 = vmatpush1.msra.mxu0 0.0
    %714 = vmatprep.subr.mxu0 0.0
    %715 = vmatpush1.msra.mxu0 0.0
    %716 = vmatprep.subr.mxu0 0.0
    %717 = vmatpush1.msra.mxu0 0.0
    %718 = vmatprep.subr.mxu0 0.0
    %719 = vmatpush1.msra.mxu0 0.0
    %720 = vmatprep.subr.mxu0 0.0
    %721 = vmatpush1.msra.mxu0 0.0
    %722 = vmatprep.subr.mxu0 0.0
    %723 = vmatpush1.msra.mxu0 0.0
    %724 = vmatprep.subr.mxu0 0.0
    %725 = vmatpush1.msra.mxu0 0.0
    %726 = vmatprep.subr.mxu0 0.0
    %727 = vmatpush1.msra.mxu0 0.0
    %728 = vmatprep.subr.mxu0 0.0
    %729 = vmatpush1.msra.mxu0 0.0
    %730 = vmatprep.subr.mxu0 0.0
    %731 = vmatpush1.msra.mxu0 0.0
    %732 = vmatprep.subr.mxu0 0.0
    %733 = vmatpush1.msra.mxu0 0.0
    %734 = vmatprep.subr.mxu0 0.0
    %735 = vmatpush1.msra.mxu0 0.0
    %736 = vmatprep.subr.mxu0 0.0
    %737 = vmatpush1.msra.mxu0 0.0
    %738 = vmatprep.subr.mxu0 0.0
    %739 = vmatpush1.msra.mxu0 0.0
    %740 = vmatprep.subr.mxu0 0.0
    %741 = vmatpush1.msra.mxu0 0.0
    %742 = vmatprep.subr.mxu0 0.0
    %743 = vmatpush1.msra.mxu0 0.0
    %744 = vmatprep.subr.mxu0 0.0
    %745 = vmatpush1.msra.mxu0 0.0
    %746 = vmatprep.subr.mxu0 0.0
    %747 = vmatpush1.msra.mxu0 0.0
    %748 = vmatprep.subr.mxu0 0.0
    %749 = vmatpush1.msra.mxu0 0.0
    %750 = vmatprep.subr.mxu0 0.0
    %751 = vmatpush1.msra.mxu0 0.0
    %752 = vmatprep.mubr.f32.mxu0 0.0
    %753 = vmatmul.mubr.f32.gmra.mrb[0].mxu0 %v671
    %v754 = vpop.f32.mrb[0].mxu0
    %v755 = vadd.f32 0.0, %v754
    %v756 = vpop.f32.mrb[0].mxu0
    %757 = vmatprep.mubr.f32.mxu0 0.0
    %758 = vmatmul.mubr.f32.gmra.mrb[0].mxu0 %v674
    %v759 = vpop.f32.mrb[0].mxu0
    %v760 = vadd.f32 0.0, %v759
    %v761 = vpop.f32.mrb[0].mxu0
    %762 = vmatprep.mubr.f32.mxu0 0.0
    %763 = vmatmul.mubr.f32.gmra.mrb[0].mxu0 %v677
    %v764 = vpop.f32.mrb[0].mxu0
    %v765 = vadd.f32 0.0, %v764
    %v766 = vpop.f32.mrb[0].mxu0
    %767 = vmatprep.mubr.f32.mxu0 0.0
    %768 = vmatmul.mubr.f32.gmra.mrb[0].mxu0 %v680
    %v769 = vpop.f32.mrb[0].mxu0
    %v770 = vadd.f32 0.0, %v769
    %v771 = vpop.f32.mrb[0].mxu0
    %772 = vmatprep.mubr.f32.mxu0 0.0
    %773 = vmatmul.mubr.f32.gmra.mrb[0].mxu0 %v683
    %v774 = vpop.f32.mrb[0].mxu0
    %v775 = vadd.f32 0.0, %v774
    %v776 = vpop.f32.mrb[0].mxu0
    %777 = vmatprep.mubr.f32.mxu0 0.0
    %778 = vmatmul.mubr.f32.gmra.mrb[0].mxu0 %v686
    %v779 = vpop.f32.mrb[0].mxu0
    %v780 = vadd.f32 0.0, %v779
    %v781 = vpop.f32.mrb[0].mxu0
    %782 = vdwg.mxu0
    %783 = vst.msk [vmem:[#allocation3] sm:$0xff] %vm178, %v755
    %784 = vst.msk [vmem:[#allocation3 + $0x8] sm:$0xff] %vm178, %v760
    %785 = vst.msk [vmem:[#allocation3 + $0x10] sm:$0xff] %vm178, %v765
    %786 = vst.msk [vmem:[#allocation3 + $0x18] sm:$0xff] %vm178, %v770
    %787 = vst.msk [vmem:[#allocation3 + $0x20] sm:$0xff] %vm178, %v775
    %788 = vst.msk [vmem:[#allocation3 + $0x28] sm:$0xff] %vm178, %v780
    %v789 = vld [vmem:[#allocation2 + $0x10] sm:$0xff]
    %v790 = vld [vmem:[#allocation2 + $0x18] sm:$0xff]
    %v791 = vld [vmem:[#allocation2 + $0x20] sm:$0xff]
    %v792 = vld [vmem:[#allocation2 + $0x28] sm:$0xff]
    %v793 = vld [vmem:[#allocation2 + $0x30] sm:$0xff]
    %v794 = vld [vmem:[#allocation2 + $0x38] sm:$0xff]
    %v795 = vld [vmem:[#allocation3] sm:$0xff]
    %v796 = vld [vmem:[#allocation3 + $0x8] sm:$0xff]
    %v797 = vld [vmem:[#allocation3 + $0x10] sm:$0xff]
    %v798 = vld [vmem:[#allocation3 + $0x18] sm:$0xff]
    %v799 = vld [vmem:[#allocation3 + $0x20] sm:$0xff]
    %v800 = vld [vmem:[#allocation3 + $0x28] sm:$0xff]
    %v801 = vadd.f32 %v789, %v795
    %v802 = vadd.f32 %v790, %v796
    %v803 = vadd.f32 %v791, %v797
    %v804 = vadd.f32 %v792, %v798
    %v805 = vadd.f32 %v793, %v799
    %v806 = vadd.f32 %v794, %v800
    %807 = vst.msk [vmem:[#allocation2 + $0x10] sm:$0xff] %vm178, %v801
    %808 = vst.msk [vmem:[#allocation2 + $0x18] sm:$0xff] %vm178, %v802
    %809 = vst.msk [vmem:[#allocation2 + $0x20] sm:$0xff] %vm178, %v803
    %810 = vst.msk [vmem:[#allocation2 + $0x28] sm:$0xff] %vm178, %v804
    %811 = vst.msk [vmem:[#allocation2 + $0x30] sm:$0xff] %vm178, %v805
    %812 = vst.msk [vmem:[#allocation2 + $0x38] sm:$0xff] %vm178, %v806
    %v813 = vld [vmem:[#allocation4] sm:$0xff]
    %v814 = vld [vmem:[#allocation4 + $0x8] sm:$0xff]
    %v815 = vld [vmem:[#allocation4 + $0x10] sm:$0xff]
    %v816 = vld [vmem:[#allocation4 + $0x18] sm:$0xff]
    %817 = vst.msk [vmem:[#allocation2] sm:$0xff] %vm178, %v813
    %818 = vst.msk [vmem:[#allocation2 + $0x8] sm:$0xff] %vm178, %v814
    %819 = vst.msk [vmem:[#allocation2 + $0x10] sm:$0xff] %vm178, %v815
    %820 = vst.msk [vmem:[#allocation2 + $0x18] sm:$0xff] %vm178, %v816
    %v821 = vld [vmem:[#allocation4] sm:$0xff]
    %v822 = vld [vmem:[#allocation4 + $0x8] sm:$0xff]
    %v823 = vld [vmem:[#allocation4 + $0x10] sm:$0xff]
    %v824 = vld [vmem:[#allocation4 + $0x18] sm:$0xff]
    %s825 = scalar_lea.vmem [#allocation6], 64
    %v826 = vld [vmem:[%s825] sm:$0xff]
    %v827 = vld [vmem:[%s825 + $0x8] sm:$0xff]
    %v828 = vld [vmem:[%s825 + $0x10] sm:$0xff]
    %v829 = vld [vmem:[%s825 + $0x18] sm:$0xff]
    %s830 = scalar_lea.vmem [#allocation2], 32
    %v831 = vld [vmem:[%s830] sm:$0xff]
    %v832 = vld [vmem:[%s830 + $0x8] sm:$0xff]
    %v833 = vld [vmem:[%s830 + $0x10] sm:$0xff]
    %v834 = vld [vmem:[%s830 + $0x18] sm:$0xff]
    %v836 = vsel %vm178, %v821, 0
    %v839 = vsel %vm178, %v822, 0
    %v842 = vsel %vm178, %v823, 0
    %v845 = vsel %vm178, %v824, 0
    %847 = vmatprep.subr.mxu0 0.0
    %848 = vmatpush1.msra.mxu0 %v826
    %849 = vmatprep.subr.mxu0 0.0
    %850 = vmatpush1.msra.mxu0 %v827
    %851 = vmatprep.subr.mxu0 0.0
    %852 = vmatpush1.msra.mxu0 %v828
    %853 = vmatprep.subr.mxu0 0.0
    %854 = vmatpush1.msra.mxu0 %v829
    %855 = vmatprep.subr.mxu0 0.0
    %856 = vmatpush1.msra.mxu0 0.0
    %857 = vmatprep.subr.mxu0 0.0
    %858 = vmatpush1.msra.mxu0 0.0
    %859 = vmatprep.subr.mxu0 0.0
    %860 = vmatpush1.msra.mxu0 0.0
    %861 = vmatprep.subr.mxu0 0.0
    %862 = vmatpush1.msra.mxu0 0.0
    %863 = vmatprep.subr.mxu0 0.0
    %864 = vmatpush1.msra.mxu0 0.0
    %865 = vmatprep.subr.mxu0 0.0
    %866 = vmatpush1.msra.mxu0 0.0
    %867 = vmatprep.subr.mxu0 0.0
    %868 = vmatpush1.msra.mxu0 0.0
    %869 = vmatprep.subr.mxu0 0.0
    %870 = vmatpush1.msra.mxu0 0.0
    %871 = vmatprep.subr.mxu0 0.0
    %872 = vmatpush1.msra.mxu0 0.0
    %873 = vmatprep.subr.mxu0 0.0
    %874 = vmatpush1.msra.mxu0 0.0
    %875 = vmatprep.subr.mxu0 0.0
    %876 = vmatpush1.msra.mxu0 0.0
    %877 = vmatprep.subr.mxu0 0.0
    %878 = vmatpush1.msra.mxu0 0.0
    %879 = vmatprep.subr.mxu0 0.0
    %880 = vmatpush1.msra.mxu0 0.0
    %881 = vmatprep.subr.mxu0 0.0
    %882 = vmatpush1.msra.mxu0 0.0
    %883 = vmatprep.subr.mxu0 0.0
    %884 = vmatpush1.msra.mxu0 0.0
    %885 = vmatprep.subr.mxu0 0.0
    %886 = vmatpush1.msra.mxu0 0.0
    %887 = vmatprep.subr.mxu0 0.0
    %888 = vmatpush1.msra.mxu0 0.0
    %889 = vmatprep.subr.mxu0 0.0
    %890 = vmatpush1.msra.mxu0 0.0
    %891 = vmatprep.subr.mxu0 0.0
    %892 = vmatpush1.msra.mxu0 0.0
    %893 = vmatprep.subr.mxu0 0.0
    %894 = vmatpush1.msra.mxu0 0.0
    %895 = vmatprep.subr.mxu0 0.0
    %896 = vmatpush1.msra.mxu0 0.0
    %897 = vmatprep.subr.mxu0 0.0
    %898 = vmatpush1.msra.mxu0 0.0
    %899 = vmatprep.subr.mxu0 0.0
    %900 = vmatpush1.msra.mxu0 0.0
    %901 = vmatprep.subr.mxu0 0.0
    %902 = vmatpush1.msra.mxu0 0.0
    %903 = vmatprep.subr.mxu0 0.0
    %904 = vmatpush1.msra.mxu0 0.0
    %905 = vmatprep.subr.mxu0 0.0
    %906 = vmatpush1.msra.mxu0 0.0
    %907 = vmatprep.subr.mxu0 0.0
    %908 = vmatpush1.msra.mxu0 0.0
    %909 = vmatprep.subr.mxu0 0.0
    %910 = vmatpush1.msra.mxu0 0.0
    %911 = vmatprep.mubr.f32.mxu0 0.0
    %912 = vmatmul.mubr.f32.gmra.mrb[0].mxu0 %v836
    %v913 = vpop.f32.mrb[0].mxu0
    %v914 = vadd.f32 %v831, %v913
    %v915 = vpop.f32.mrb[0].mxu0
    %916 = vmatprep.mubr.f32.mxu0 0.0
    %917 = vmatmul.mubr.f32.gmra.mrb[0].mxu0 %v839
    %v918 = vpop.f32.mrb[0].mxu0
    %v919 = vadd.f32 %v832, %v918
    %v920 = vpop.f32.mrb[0].mxu0
    %921 = vmatprep.mubr.f32.mxu0 0.0
    %922 = vmatmul.mubr.f32.gmra.mrb[0].mxu0 %v842
    %v923 = vpop.f32.mrb[0].mxu0
    %v924 = vadd.f32 %v833, %v923
    %v925 = vpop.f32.mrb[0].mxu0
    %926 = vmatprep.mubr.f32.mxu0 0.0
    %927 = vmatmul.mubr.f32.gmra.mrb[0].mxu0 %v845
    %v928 = vpop.f32.mrb[0].mxu0
    %v929 = vadd.f32 %v834, %v928
    %v930 = vpop.f32.mrb[0].mxu0
    %931 = vdwg.mxu0
    %932 = vst.msk [vmem:[%s830] sm:$0xff] %vm178, %v914
    %933 = vst.msk [vmem:[%s830 + $0x8] sm:$0xff] %vm178, %v919
    %934 = vst.msk [vmem:[%s830 + $0x10] sm:$0xff] %vm178, %v924
    %935 = vst.msk [vmem:[%s830 + $0x18] sm:$0xff] %vm178, %v929
    %936 = vst.msk [vmem:[#allocation5] sm:$0xff] %vm178, %v929
    %v937 = vld [vmem:[#allocation2] sm:$0xff]
    %v938 = vld [vmem:[#allocation2 + $0x8] sm:$0xff]
    %v939 = vld [vmem:[#allocation2 + $0x10] sm:$0xff]
    %v940 = vld [vmem:[#allocation2 + $0x18] sm:$0xff]
    %v941 = vld [vmem:[#allocation2 + $0x20] sm:$0xff]
    %v942 = vld [vmem:[#allocation2 + $0x28] sm:$0xff]
    %v943 = vld [vmem:[#allocation2 + $0x30] sm:$0xff]
    %v944 = vld [vmem:[#allocation2 + $0x38] sm:$0xff]
    %v945 = vld [vmem:[%s3] sm:$0xff]
    %v946 = vld [vmem:[%s3 + $0x8] sm:$0xff]
    %v947 = vld [vmem:[%s3 + $0x10] sm:$0xff]
    %v948 = vld [vmem:[%s3 + $0x18] sm:$0xff]
    %v950 = vsel %vm178, %v937, 0
    %v953 = vsel %vm178, %v938, 0
    %v956 = vsel %vm178, %v939, 0
    %v959 = vsel %vm178, %v940, 0
    %v962 = vsel %vm178, %v941, 0
    %v965 = vsel %vm178, %v942, 0
    %v968 = vsel %vm178, %v943, 0
    %v971 = vsel %vm178, %v944, 0
    %973 = vmatprep.subr.mxu0 0.0
    %974 = vmatpush1.msra.mxu0 %v945
    %975 = vmatprep.subr.mxu0 0.0
    %976 = vmatpush1.msra.mxu0 %v946
    %977 = vmatprep.subr.mxu0 0.0
    %978 = vmatpush1.msra.mxu0 %v947
    %979 = vmatprep.subr.mxu0 0.0
    %980 = vmatpush1.msra.mxu0 %v948
    %981 = vmatprep.subr.mxu0 0.0
    %982 = vmatpush1.msra.mxu0 0.0
    %983 = vmatprep.subr.mxu0 0.0
    %984 = vmatpush1.msra.mxu0 0.0
    %985 = vmatprep.subr.mxu0 0.0
    %986 = vmatpush1.msra.mxu0 0.0
    %987 = vmatprep.subr.mxu0 0.0
    %988 = vmatpush1.msra.mxu0 0.0
    %989 = vmatprep.subr.mxu0 0.0
    %990 = vmatpush1.msra.mxu0 0.0
    %991 = vmatprep.subr.mxu0 0.0
    %992 = vmatpush1.msra.mxu0 0.0
    %993 = vmatprep.subr.mxu0 0.0
    %994 = vmatpush1.msra.mxu0 0.0
    %995 = vmatprep.subr.mxu0 0.0
    %996 = vmatpush1.msra.mxu0 0.0
    %997 = vmatprep.subr.mxu0 0.0
    %998 = vmatpush1.msra.mxu0 0.0
    %999 = vmatprep.subr.mxu0 0.0
    %1000 = vmatpush1.msra.mxu0 0.0
    %1001 = vmatprep.subr.mxu0 0.0
    %1002 = vmatpush1.msra.mxu0 0.0
    %1003 = vmatprep.subr.mxu0 0.0
    %1004 = vmatpush1.msra.mxu0 0.0
    %1005 = vmatprep.subr.mxu0 0.0
    %1006 = vmatpush1.msra.mxu0 0.0
    %1007 = vmatprep.subr.mxu0 0.0
    %1008 = vmatpush1.msra.mxu0 0.0
    %1009 = vmatprep.subr.mxu0 0.0
    %1010 = vmatpush1.msra.mxu0 0.0
    %1011 = vmatprep.subr.mxu0 0.0
    %1012 = vmatpush1.msra.mxu0 0.0
    %1013 = vmatprep.subr.mxu0 0.0
    %1014 = vmatpush1.msra.mxu0 0.0
    %1015 = vmatprep.subr.mxu0 0.0
    %1016 = vmatpush1.msra.mxu0 0.0
    %1017 = vmatprep.subr.mxu0 0.0
    %1018 = vmatpush1.msra.mxu0 0.0
    %1019 = vmatprep.subr.mxu0 0.0
    %1020 = vmatpush1.msra.mxu0 0.0
    %1021 = vmatprep.subr.mxu0 0.0
    %1022 = vmatpush1.msra.mxu0 0.0
    %1023 = vmatprep.subr.mxu0 0.0
    %1024 = vmatpush1.msra.mxu0 0.0
    %1025 = vmatprep.subr.mxu0 0.0
    %1026 = vmatpush1.msra.mxu0 0.0
    %1027 = vmatprep.subr.mxu0 0.0
    %1028 = vmatpush1.msra.mxu0 0.0
    %1029 = vmatprep.subr.mxu0 0.0
    %1030 = vmatpush1.msra.mxu0 0.0
    %1031 = vmatprep.subr.mxu0 0.0
    %1032 = vmatpush1.msra.mxu0 0.0
    %1033 = vmatprep.subr.mxu0 0.0
    %1034 = vmatpush1.msra.mxu0 0.0
    %1035 = vmatprep.subr.mxu0 0.0
    %1036 = vmatpush1.msra.mxu0 0.0
    %1037 = vmatprep.mubr.f32.mxu0 0.0
    %1038 = vmatmul.mubr.f32.gmra.mrb[0].mxu0 %v950
    %v1039 = vpop.f32.mrb[0].mxu0
    %v1040 = vadd.f32 0.0, %v1039
    %v1041 = vpop.f32.mrb[0].mxu0
    %1042 = vmatprep.mubr.f32.mxu0 0.0
    %1043 = vmatmul.mubr.f32.gmra.mrb[0].mxu0 %v953
    %v1044 = vpop.f32.mrb[0].mxu0
    %v1045 = vadd.f32 0.0, %v1044
    %v1046 = vpop.f32.mrb[0].mxu0
    %1047 = vmatprep.mubr.f32.mxu0 0.0
    %1048 = vmatmul.mubr.f32.gmra.mrb[0].mxu0 %v956
    %v1049 = vpop.f32.mrb[0].mxu0
    %v1050 = vadd.f32 0.0, %v1049
    %v1051 = vpop.f32.mrb[0].mxu0
    %1052 = vmatprep.mubr.f32.mxu0 0.0
    %1053 = vmatmul.mubr.f32.gmra.mrb[0].mxu0 %v959
    %v1054 = vpop.f32.mrb[0].mxu0
    %v1055 = vadd.f32 0.0, %v1054
    %v1056 = vpop.f32.mrb[0].mxu0
    %1057 = vmatprep.mubr.f32.mxu0 0.0
    %1058 = vmatmul.mubr.f32.gmra.mrb[0].mxu0 %v962
    %v1059 = vpop.f32.mrb[0].mxu0
    %v1060 = vadd.f32 0.0, %v1059
    %v1061 = vpop.f32.mrb[0].mxu0
    %1062 = vmatprep.mubr.f32.mxu0 0.0
    %1063 = vmatmul.mubr.f32.gmra.mrb[0].mxu0 %v965
    %v1064 = vpop.f32.mrb[0].mxu0
    %v1065 = vadd.f32 0.0, %v1064
    %v1066 = vpop.f32.mrb[0].mxu0
    %1067 = vmatprep.mubr.f32.mxu0 0.0
    %1068 = vmatmul.mubr.f32.gmra.mrb[0].mxu0 %v968
    %v1069 = vpop.f32.mrb[0].mxu0
    %v1070 = vadd.f32 0.0, %v1069
    %v1071 = vpop.f32.mrb[0].mxu0
    %1072 = vmatprep.mubr.f32.mxu0 0.0
    %1073 = vmatmul.mubr.f32.gmra.mrb[0].mxu0 %v971
    %v1074 = vpop.f32.mrb[0].mxu0
    %v1075 = vadd.f32 0.0, %v1074
    %v1076 = vpop.f32.mrb[0].mxu0
    %1077 = vdwg.mxu0
    %1078 = vst [vmem:[#allocation9] sm:$0xff] %v1040
    %1079 = vst [vmem:[#allocation9 + $0x8] sm:$0xff] %v1045
    %1080 = vst [vmem:[#allocation9 + $0x10] sm:$0xff] %v1050
    %1081 = vst [vmem:[#allocation9 + $0x18] sm:$0xff] %v1055
    %1082 = vst [vmem:[#allocation9 + $0x20] sm:$0xff] %v1060
    %1083 = vst [vmem:[#allocation9 + $0x28] sm:$0xff] %v1065
    %1084 = vst [vmem:[#allocation9 + $0x30] sm:$0xff] %v1070
    %1085 = vst [vmem:[#allocation9 + $0x38] sm:$0xff] %v1075
    // Predicated region
    $region26: #{tpu_custom_call.1} parent=1 // pred_check
      _
    $region27: #{tpu_custom_call.1} parent=1 // pred_check_branch
      %1087 = sbr.rel (0) target = $region29
    $region28: #{tpu_custom_call.1} parent=1 // pred_region
      %s1089 = ssub.s32 1024, 1024
      %1090 = vsyncadd [#allocation8], %s1089
      %s1091 = sshll.u32 [#allocation9], 4
      %s1092 = int_to_ptr.vmem [resolvable:$true] %s1091
      %1097 = dma.vmem_to_hbm [thread:$0]  %s1092, 1024, %s4, [#allocation8], 128, 128, 8
    $region29: #{tpu_custom_call.1} parent=1 // pred_fallthru
      _
    // Predicated region
    $region30: #{tpu_custom_call.1} parent=1 // pred_check
      _
    $region31: #{tpu_custom_call.1} parent=1 // pred_check_branch
      %1099 = sbr.rel (0) target = $region33
    $region32: #{tpu_custom_call.1} parent=1 // pred_region
      %1100 = dma.done [#allocation8], 1024
    $region33: #{tpu_custom_call.1} parent=1 // pred_fallthru
      _
    %1101 = vsyncpa [#allocation7], 1
    %1102 = vsyncpa [#allocation8], 1

</llo_original>
